<compile_context>
chip_gen: v6e
topology: v6e:2x2x1
jax: 0.10.0
libtpu: 0.0.40
codegen_flags: <defaults>
</compile_context>

<pallas_src>
import jax
import jax.numpy as jnp
from jax.experimental import pallas as pl
from jax.experimental.pallas import tpu as pltpu


# ----------------------------------------------------------------------------
# Kernel
# ----------------------------------------------------------------------------
def multi_context_kernel(x_ref, tb_ref, bb_ref, tf_ref, bf_ref, out_ref,
                         xpad_ref, catpad_ref):
    """One grid step = one whole image, lane-dense row slabs.

    x_ref      : (H, W*C)                input image rows (lane = w*C + c)
    tb_ref     : (5, (W+4)*C, W*3C)      branch banded weights (BN folded)
    bb_ref     : (1, W*3C)               branch bias, tiled over W (BN folded)
    tf_ref     : (3, (W+2)*3C, W*C)      final 3x3 banded weights (BN folded)
    bf_ref     : (1, W*C)                final bias, tiled over W (BN folded)
    out_ref    : (H, W*C)                output rows
    xpad_ref   : (H+4, (W+4)*C)          zero-padded input staging (scratch)
    catpad_ref : (H+2, (W+2)*3C)         zero-padded concat staging (scratch)
    """
    H, WC = x_ref.shape
    WpC = xpad_ref.shape[1]                 # (W+4)*C
    W3C = bb_ref.shape[1]                   # W*3C
    C = (WpC - WC) // 4
    C3 = 3 * C

    # ---- stage the zero-padded input (pad 2 in H and W, channels-last) ----
    xpad_ref[...] = jnp.zeros_like(xpad_ref)
    xpad_ref[2:2 + H, 2 * C:2 * C + WC] = x_ref[...]

    # ---- fused branch convs (1x1 / 3x3 / 5x5 + BN folded) -> 3C concat ----
    # dx taps and input channels are folded into K via the banded weight;
    # only the 5 dy taps remain as an accumulation chain.
    acc = jnp.zeros((H, W3C), jnp.float32)
    for dy in range(5):
        acc = acc + jnp.dot(xpad_ref[dy:dy + H, :], tb_ref[dy],
                            preferred_element_type=jnp.float32)
    cat = jnp.maximum(acc + bb_ref[...], 0.0)      # bias (BN folded) + ReLU

    # ---- stage the zero-padded concat (pad 1 in H and W) ----
    catpad_ref[...] = jnp.zeros_like(catpad_ref)
    catpad_ref[1:1 + H, C3:C3 + W3C] = cat

    # ---- final 3x3 conv over the concat (BN folded, no ReLU) ----
    acc2 = jnp.zeros((H, WC), jnp.float32)
    for dy in range(3):
        acc2 = acc2 + jnp.dot(catpad_ref[dy:dy + H, :], tf_ref[dy],
                              preferred_element_type=jnp.float32)

    out_ref[...] = (acc2 + bf_ref[...]).astype(out_ref.dtype)


# ----------------------------------------------------------------------------
# Parameter preparation (plain JAX glue)
# ----------------------------------------------------------------------------
def _fold_bn(w_hwio, b, gamma, beta, mean, var, eps=1e-5):
    """Fold eval-mode BatchNorm into conv weight (HWIO) and bias."""
    s = gamma / jnp.sqrt(var + eps)                        # (Cout,)
    w_f = w_hwio * s                                       # scale output channels
    b_f = (b - mean) * s + beta
    return w_f, b_f.reshape(1, -1)


def _build_fused_branch_weight(w1, w3, w5):
    """Embed folded 1x1/3x3/5x5 HWIO weights into one (5, 5, Cin, 3C) tap table.

    Output channel blocks: [0:C]=1x1 branch, [C:2C]=3x3 branch, [2C:3C]=5x5
    branch (matches torch.cat([x1, x2, x3], dim=1) ordering).
    """
    C = w1.shape[2]
    wb = jnp.zeros((5, 5, C, 3 * C), jnp.float32)
    wb = wb.at[:, :, :, 2 * C:3 * C].set(w5)               # 5x5, pad 2
    wb = wb.at[1:4, 1:4, :, C:2 * C].set(w3)               # 3x3 embedded, pad 1
    wb = wb.at[2, 2, :, 0:C].set(w1[0, 0])                 # 1x1 at center tap
    return wb


def _band_matrix(w_hwio, width):
    """Per-dy banded (block-Toeplitz) matrices for conv-as-matmul along W.

    w_hwio : (KH, KW, Cin, Cout) folded conv weight
    width  : output spatial width W
    returns (KH, (W+KW-1)*Cin, W*Cout) with
            T[dy][(w+dx)*Cin + ci, w*Cout + co] = w_hwio[dy, dx, ci, co]
    so that  y[h, w*Cout+co] = sum_dy  xpad_row[h+dy, :] @ T[dy].
    """
    KH, KW, Cin, Cout = w_hwio.shape
    p = jnp.arange(width + KW - 1)[:, None, None]
    w = jnp.arange(width)[None, :, None]
    d = jnp.arange(KW)[None, None, :]
    sel = (p == w + d).astype(w_hwio.dtype)                # (W+KW-1, W, KW)
    t = jnp.einsum('pwd,ydio->ypiwo', sel, w_hwio)
    return t.reshape(KH, (width + KW - 1) * Cin, width * Cout)


def init_params(key, C):
    ks = jax.random.split(key, 12)

    def conv_w(k, kh, kw, cin, cout):
        return jax.random.normal(k, (kh, kw, cin, cout), jnp.float32) * 0.1

    def conv_b(k, cout):
        return jax.random.normal(k, (cout,), jnp.float32) * 0.05

    def bn(k, c):
        k1, k2, k3, k4 = jax.random.split(k, 4)
        gamma = jax.random.uniform(k1, (c,), jnp.float32, 0.5, 1.5)
        beta = jax.random.normal(k2, (c,), jnp.float32) * 0.1
        mean = jax.random.normal(k3, (c,), jnp.float32) * 0.1
        var = jax.random.uniform(k4, (c,), jnp.float32, 0.5, 1.5)
        return gamma, beta, mean, var

    p1 = _fold_bn(conv_w(ks[0], 1, 1, C, C), conv_b(ks[1], C), *bn(ks[2], C))
    p3 = _fold_bn(conv_w(ks[3], 3, 3, C, C), conv_b(ks[4], C), *bn(ks[5], C))
    p5 = _fold_bn(conv_w(ks[6], 5, 5, C, C), conv_b(ks[7], C), *bn(ks[8], C))
    pf = _fold_bn(conv_w(ks[9], 3, 3, 3 * C, C), conv_b(ks[10], C), *bn(ks[11], C))
    return (p1, p3, p5, pf)


# ----------------------------------------------------------------------------
# Public wrapper (NCHW in / NCHW out)
# ----------------------------------------------------------------------------
def multi_context_forward(x_nchw, params):
    B, C, H, W = x_nchw.shape
    (w1, b1), (w3, b3), (w5, b5), (wf, bf) = params        # BN-folded, f32

    # banded conv-as-matmul weights
    wb = _build_fused_branch_weight(w1, w3, w5)            # (5, 5, C, 3C)
    tb = _band_matrix(wb, W)                               # (5, (W+4)*C,  W*3C)
    tf = _band_matrix(wf, W)                               # (3, (W+2)*3C, W*C)

    # biases tiled along W so the in-kernel bias add is a plain row broadcast
    bb_row = jnp.tile(jnp.concatenate([b1, b3, b5], axis=-1), (1, W))   # (1, W*3C)
    bf_row = jnp.tile(bf, (1, W))                                       # (1, W*C)

    # NCHW -> lane-dense row slabs (B, H, W*C); single transpose+reshape pass
    x_rows = jnp.transpose(x_nchw, (0, 2, 3, 1)).reshape(B, H, W * C)

    out = pl.pallas_call(
        multi_context_kernel,
        out_shape=jax.ShapeDtypeStruct((B, H, W * C), jnp.float32),
        grid_spec=pltpu.PrefetchScalarGridSpec(
            num_scalar_prefetch=0,
            grid=(B,),
            in_specs=[
                pl.BlockSpec((None, H, W * C), lambda b: (b, 0, 0)),
                pl.BlockSpec((5, (W + 4) * C, W * 3 * C), lambda b: (0, 0, 0)),
                pl.BlockSpec((1, W * 3 * C), lambda b: (0, 0)),
                pl.BlockSpec((3, (W + 2) * 3 * C, W * C), lambda b: (0, 0, 0)),
                pl.BlockSpec((1, W * C), lambda b: (0, 0)),
            ],
            out_specs=pl.BlockSpec((None, H, W * C), lambda b: (b, 0, 0)),
            scratch_shapes=[
                pltpu.VMEM((H + 4, (W + 4) * C), jnp.float32),
                pltpu.VMEM((H + 2, (W + 2) * 3 * C), jnp.float32),
            ],
        ),
        compiler_params=pltpu.CompilerParams(
            dimension_semantics=("parallel",)),
    )(x_rows, tb, bb_row, tf, bf_row)

    # (B, H, W*C) -> (B, H, W, C) -> NCHW
    return jnp.transpose(out.reshape(B, H, W, C), (0, 3, 1, 2))


# ----------------------------------------------------------------------------
# Plain-JAX reference (f32) for a correctness check
# ----------------------------------------------------------------------------
def reference_forward(x_nhwc, params):
    (w1, b1), (w3, b3), (w5, b5), (wf, bf) = params

    def conv(x, w, b):
        y = jax.lax.conv_general_dilated(
            x, w, window_strides=(1, 1), padding="SAME",
            dimension_numbers=("NHWC", "HWIO", "NHWC"))
        return y + b.reshape(1, 1, 1, -1)

    x1 = jax.nn.relu(conv(x_nhwc, w1, b1))
    x2 = jax.nn.relu(conv(x_nhwc, w3, b3))
    x3 = jax.nn.relu(conv(x_nhwc, w5, b5))
    cat = jnp.concatenate([x1, x2, x3], axis=-1)
    return conv(cat, wf, bf)


if __name__ == "__main__":
    key = jax.random.PRNGKey(0)
    kx, kp = jax.random.split(key)
    B, C, H, W = 2, 8, 16, 16            # Multi_Context(inchannels=8); W*C = 128 lanes
    x = jax.random.normal(kx, (B, C, H, W), jnp.float32)
    params = init_params(kp, C)

    y = multi_context_forward(x, params)
    jax.block_until_ready(y)
    assert y.shape == (B, C, H, W) and y.dtype == jnp.float32

    # numerical check against the f32 XLA reference
    ref = jnp.transpose(reference_forward(jnp.transpose(x, (0, 2, 3, 1)), params),
                        (0, 3, 1, 2))
    rel = float(jnp.max(jnp.abs(y - ref)) / (jnp.max(jnp.abs(ref)) + 1e-6))
    assert rel < 2e-2, f"mismatch vs reference: rel={rel}"

    print("KERNEL_OK")
</pallas_src>

<mosaic_0001>
module attributes {stable_mosaic.version = 11 : i64} {
  func.func @multi_context_kernel(%arg0: i32, %arg1: memref<1x16x128xf32, #tpu.memory_space<vmem>>, %arg2: memref<5x160x384xf32, #tpu.memory_space<vmem>>, %arg3: memref<1x384xf32, #tpu.memory_space<vmem>>, %arg4: memref<3x432x128xf32, #tpu.memory_space<vmem>>, %arg5: memref<1x128xf32, #tpu.memory_space<vmem>>, %arg6: memref<1x16x128xf32, #tpu.memory_space<vmem>>, %arg7: memref<20x160xf32, #tpu.memory_space<vmem>>, %arg8: memref<18x432xf32, #tpu.memory_space<vmem>>) attributes {dimension_semantics = [#tpu.dimension_semantics<parallel>], iteration_bounds = array<i64: 2>, scalar_prefetch = 0 : i64, scratch_operands = 2 : i64, tpu.core_type = #tpu.core_type<tc>, window_params = [{transform_indices = @transform_0, window_bounds = array<i64: 1, 16, 128>}, {pipeline_mode = #tpu.pipeline_mode<synchronous>, transform_indices = @transform_1, window_bounds = array<i64: 5, 160, 384>}, {pipeline_mode = #tpu.pipeline_mode<synchronous>, transform_indices = @transform_2, window_bounds = array<i64: 1, 384>}, {pipeline_mode = #tpu.pipeline_mode<synchronous>, transform_indices = @transform_3, window_bounds = array<i64: 3, 432, 128>}, {pipeline_mode = #tpu.pipeline_mode<synchronous>, transform_indices = @transform_4, window_bounds = array<i64: 1, 128>}, {transform_indices = @transform_5, window_bounds = array<i64: 1, 16, 128>}]} {
    %cst = arith.constant 0.000000e+00 : f32
    %0 = vector.broadcast %cst : f32 to vector<20x160xf32>
    %c0 = arith.constant 0 : index
    %c0_0 = arith.constant 0 : index
    %1 = vector.load %arg7[%c0, %c0_0] : memref<20x160xf32, #tpu.memory_space<vmem>>, vector<20x160xf32>
    tpu.vector_store %arg7[%c0, %c0_0], %0 {strides = array<i32>} : memref<20x160xf32, #tpu.memory_space<vmem>>, vector<20x160xf32>,
    %c0_1 = arith.constant 0 : index
    %c0_2 = arith.constant 0 : index
    %c0_3 = arith.constant 0 : index
    %2 = vector.load %arg1[%c0_1, %c0_2, %c0_3] : memref<1x16x128xf32, #tpu.memory_space<vmem>>, vector<1x16x128xf32>
    %3 = vector.shape_cast %2 : vector<1x16x128xf32> to vector<16x128xf32>
    %c2 = arith.constant 2 : index
    %c16 = arith.constant 16 : index
    %4 = vector.load %arg7[%c2, %c16] : memref<20x160xf32, #tpu.memory_space<vmem>>, vector<16x128xf32>
    tpu.vector_store %arg7[%c2, %c16], %3 {strides = array<i32>} : memref<20x160xf32, #tpu.memory_space<vmem>>, vector<16x128xf32>,
    %cst_4 = arith.constant 0.000000e+00 : f32
    %5 = vector.broadcast %cst_4 : f32 to vector<16x384xf32>
    %c0_5 = arith.constant 0 : index
    %c0_6 = arith.constant 0 : index
    %6 = vector.load %arg7[%c0_5, %c0_6] : memref<20x160xf32, #tpu.memory_space<vmem>>, vector<16x160xf32>
    %c0_7 = arith.constant 0 : index
    %c0_8 = arith.constant 0 : index
    %c0_9 = arith.constant 0 : index
    %7 = vector.load %arg2[%c0_7, %c0_8, %c0_9] : memref<5x160x384xf32, #tpu.memory_space<vmem>>, vector<1x160x384xf32>
    %8 = vector.shape_cast %7 : vector<1x160x384xf32> to vector<160x384xf32>
    %cst_10 = arith.constant dense<0.000000e+00> : vector<16x384xf32>
    %9 = tpu.matmul %6, %8, %cst_10 {dimension_numbers = #tpu.dot_dimension_numbers<[1], [0], [0], [1], [0, 0, 1, 1], [], []>} : vector<16x160xf32>, vector<160x384xf32>, vector<16x384xf32> -> vector<16x384xf32>
    %10 = arith.addf %5, %9 : vector<16x384xf32>
    %c1 = arith.constant 1 : index
    %c0_11 = arith.constant 0 : index
    %11 = vector.load %arg7[%c1, %c0_11] : memref<20x160xf32, #tpu.memory_space<vmem>>, vector<16x160xf32>
    %c1_12 = arith.constant 1 : index
    %c0_13 = arith.constant 0 : index
    %c0_14 = arith.constant 0 : index
    %12 = vector.load %arg2[%c1_12, %c0_13, %c0_14] : memref<5x160x384xf32, #tpu.memory_space<vmem>>, vector<1x160x384xf32>
    %13 = vector.shape_cast %12 : vector<1x160x384xf32> to vector<160x384xf32>
    %cst_15 = arith.constant dense<0.000000e+00> : vector<16x384xf32>
    %14 = tpu.matmul %11, %13, %cst_15 {dimension_numbers = #tpu.dot_dimension_numbers<[1], [0], [0], [1], [0, 0, 1, 1], [], []>} : vector<16x160xf32>, vector<160x384xf32>, vector<16x384xf32> -> vector<16x384xf32>
    %15 = arith.addf %10, %14 : vector<16x384xf32>
    %c2_16 = arith.constant 2 : index
    %c0_17 = arith.constant 0 : index
    %16 = vector.load %arg7[%c2_16, %c0_17] : memref<20x160xf32, #tpu.memory_space<vmem>>, vector<16x160xf32>
    %c2_18 = arith.constant 2 : index
    %c0_19 = arith.constant 0 : index
    %c0_20 = arith.constant 0 : index
    %17 = vector.load %arg2[%c2_18, %c0_19, %c0_20] : memref<5x160x384xf32, #tpu.memory_space<vmem>>, vector<1x160x384xf32>
    %18 = vector.shape_cast %17 : vector<1x160x384xf32> to vector<160x384xf32>
    %cst_21 = arith.constant dense<0.000000e+00> : vector<16x384xf32>
    %19 = tpu.matmul %16, %18, %cst_21 {dimension_numbers = #tpu.dot_dimension_numbers<[1], [0], [0], [1], [0, 0, 1, 1], [], []>} : vector<16x160xf32>, vector<160x384xf32>, vector<16x384xf32> -> vector<16x384xf32>
    %20 = arith.addf %15, %19 : vector<16x384xf32>
    %c3 = arith.constant 3 : index
    %c0_22 = arith.constant 0 : index
    %21 = vector.load %arg7[%c3, %c0_22] : memref<20x160xf32, #tpu.memory_space<vmem>>, vector<16x160xf32>
    %c3_23 = arith.constant 3 : index
    %c0_24 = arith.constant 0 : index
    %c0_25 = arith.constant 0 : index
    %22 = vector.load %arg2[%c3_23, %c0_24, %c0_25] : memref<5x160x384xf32, #tpu.memory_space<vmem>>, vector<1x160x384xf32>
    %23 = vector.shape_cast %22 : vector<1x160x384xf32> to vector<160x384xf32>
    %cst_26 = arith.constant dense<0.000000e+00> : vector<16x384xf32>
    %24 = tpu.matmul %21, %23, %cst_26 {dimension_numbers = #tpu.dot_dimension_numbers<[1], [0], [0], [1], [0, 0, 1, 1], [], []>} : vector<16x160xf32>, vector<160x384xf32>, vector<16x384xf32> -> vector<16x384xf32>
    %25 = arith.addf %20, %24 : vector<16x384xf32>
    %c4 = arith.constant 4 : index
    %c0_27 = arith.constant 0 : index
    %26 = vector.load %arg7[%c4, %c0_27] : memref<20x160xf32, #tpu.memory_space<vmem>>, vector<16x160xf32>
    %c4_28 = arith.constant 4 : index
    %c0_29 = arith.constant 0 : index
    %c0_30 = arith.constant 0 : index
    %27 = vector.load %arg2[%c4_28, %c0_29, %c0_30] : memref<5x160x384xf32, #tpu.memory_space<vmem>>, vector<1x160x384xf32>
    %28 = vector.shape_cast %27 : vector<1x160x384xf32> to vector<160x384xf32>
    %cst_31 = arith.constant dense<0.000000e+00> : vector<16x384xf32>
    %29 = tpu.matmul %26, %28, %cst_31 {dimension_numbers = #tpu.dot_dimension_numbers<[1], [0], [0], [1], [0, 0, 1, 1], [], []>} : vector<16x160xf32>, vector<160x384xf32>, vector<16x384xf32> -> vector<16x384xf32>
    %30 = arith.addf %25, %29 : vector<16x384xf32>
    %c0_32 = arith.constant 0 : index
    %c0_33 = arith.constant 0 : index
    %31 = vector.load %arg3[%c0_32, %c0_33] : memref<1x384xf32, #tpu.memory_space<vmem>>, vector<1x384xf32>
    %32 = vector.broadcast %31 : vector<1x384xf32> to vector<16x384xf32>
    %33 = arith.addf %30, %32 : vector<16x384xf32>
    %cst_34 = arith.constant 0.000000e+00 : f32
    %34 = vector.broadcast %cst_34 : f32 to vector<16x384xf32>
    %35 = arith.maximumf %33, %34 : vector<16x384xf32>
    %cst_35 = arith.constant 0.000000e+00 : f32
    %36 = vector.broadcast %cst_35 : f32 to vector<18x432xf32>
    %c0_36 = arith.constant 0 : index
    %c0_37 = arith.constant 0 : index
    %37 = vector.load %arg8[%c0_36, %c0_37] : memref<18x432xf32, #tpu.memory_space<vmem>>, vector<18x432xf32>
    tpu.vector_store %arg8[%c0_36, %c0_37], %36 {strides = array<i32>} : memref<18x432xf32, #tpu.memory_space<vmem>>, vector<18x432xf32>,
    %c1_38 = arith.constant 1 : index
    %c24 = arith.constant 24 : index
    %38 = vector.load %arg8[%c1_38, %c24] : memref<18x432xf32, #tpu.memory_space<vmem>>, vector<16x384xf32>
    tpu.vector_store %arg8[%c1_38, %c24], %35 {strides = array<i32>} : memref<18x432xf32, #tpu.memory_space<vmem>>, vector<16x384xf32>,
    %cst_39 = arith.constant 0.000000e+00 : f32
    %39 = vector.broadcast %cst_39 : f32 to vector<16x128xf32>
    %c0_40 = arith.constant 0 : index
    %c0_41 = arith.constant 0 : index
    %40 = vector.load %arg8[%c0_40, %c0_41] : memref<18x432xf32, #tpu.memory_space<vmem>>, vector<16x432xf32>
    %c0_42 = arith.constant 0 : index
    %c0_43 = arith.constant 0 : index
    %c0_44 = arith.constant 0 : index
    %41 = vector.load %arg4[%c0_42, %c0_43, %c0_44] : memref<3x432x128xf32, #tpu.memory_space<vmem>>, vector<1x432x128xf32>
    %42 = vector.shape_cast %41 : vector<1x432x128xf32> to vector<432x128xf32>
    %cst_45 = arith.constant dense<0.000000e+00> : vector<16x128xf32>
    %43 = tpu.matmul %40, %42, %cst_45 {dimension_numbers = #tpu.dot_dimension_numbers<[1], [0], [0], [1], [0, 0, 1, 1], [], []>} : vector<16x432xf32>, vector<432x128xf32>, vector<16x128xf32> -> vector<16x128xf32>
    %44 = arith.addf %39, %43 : vector<16x128xf32>
    %c1_46 = arith.constant 1 : index
    %c0_47 = arith.constant 0 : index
    %45 = vector.load %arg8[%c1_46, %c0_47] : memref<18x432xf32, #tpu.memory_space<vmem>>, vector<16x432xf32>
    %c1_48 = arith.constant 1 : index
    %c0_49 = arith.constant 0 : index
    %c0_50 = arith.constant 0 : index
    %46 = vector.load %arg4[%c1_48, %c0_49, %c0_50] : memref<3x432x128xf32, #tpu.memory_space<vmem>>, vector<1x432x128xf32>
    %47 = vector.shape_cast %46 : vector<1x432x128xf32> to vector<432x128xf32>
    %cst_51 = arith.constant dense<0.000000e+00> : vector<16x128xf32>
    %48 = tpu.matmul %45, %47, %cst_51 {dimension_numbers = #tpu.dot_dimension_numbers<[1], [0], [0], [1], [0, 0, 1, 1], [], []>} : vector<16x432xf32>, vector<432x128xf32>, vector<16x128xf32> -> vector<16x128xf32>
    %49 = arith.addf %44, %48 : vector<16x128xf32>
    %c2_52 = arith.constant 2 : index
    %c0_53 = arith.constant 0 : index
    %50 = vector.load %arg8[%c2_52, %c0_53] : memref<18x432xf32, #tpu.memory_space<vmem>>, vector<16x432xf32>
    %c2_54 = arith.constant 2 : index
    %c0_55 = arith.constant 0 : index
    %c0_56 = arith.constant 0 : index
    %51 = vector.load %arg4[%c2_54, %c0_55, %c0_56] : memref<3x432x128xf32, #tpu.memory_space<vmem>>, vector<1x432x128xf32>
    %52 = vector.shape_cast %51 : vector<1x432x128xf32> to vector<432x128xf32>
    %cst_57 = arith.constant dense<0.000000e+00> : vector<16x128xf32>
    %53 = tpu.matmul %50, %52, %cst_57 {dimension_numbers = #tpu.dot_dimension_numbers<[1], [0], [0], [1], [0, 0, 1, 1], [], []>} : vector<16x432xf32>, vector<432x128xf32>, vector<16x128xf32> -> vector<16x128xf32>
    %54 = arith.addf %49, %53 : vector<16x128xf32>
    %c0_58 = arith.constant 0 : index
    %c0_59 = arith.constant 0 : index
    %55 = vector.load %arg5[%c0_58, %c0_59] : memref<1x128xf32, #tpu.memory_space<vmem>>, vector<1x128xf32>
    %56 = vector.broadcast %55 : vector<1x128xf32> to vector<16x128xf32>
    %57 = arith.addf %54, %56 : vector<16x128xf32>
    %c0_60 = arith.constant 0 : index
    %c0_61 = arith.constant 0 : index
    %c0_62 = arith.constant 0 : index
    %58 = vector.load %arg6[%c0_60, %c0_61, %c0_62] : memref<1x16x128xf32, #tpu.memory_space<vmem>>, vector<1x16x128xf32>
    %59 = vector.shape_cast %58 : vector<1x16x128xf32> to vector<16x128xf32>
    %60 = vector.shape_cast %57 : vector<16x128xf32> to vector<1x16x128xf32>
    tpu.vector_store %arg6[%c0_60, %c0_61, %c0_62], %60 {strides = array<i32>} : memref<1x16x128xf32, #tpu.memory_space<vmem>>, vector<1x16x128xf32>,
    return
  }
  func.func @transform_0(%arg0: i32) -> (i32, i32, i32) {
    %c0_i32 = arith.constant 0 : i32
    %c0_i32_0 = arith.constant 0 : i32
    %c0_i32_1 = arith.constant 0 : i32
    return %arg0, %c0_i32, %c0_i32_0 : i32, i32, i32
  }
  func.func @transform_1(%arg0: i32) -> (i32, i32, i32) {
    %c0_i32 = arith.constant 0 : i32
    %c0_i32_0 = arith.constant 0 : i32
    %c0_i32_1 = arith.constant 0 : i32
    %c0_i32_2 = arith.constant 0 : i32
    return %c0_i32, %c0_i32_0, %c0_i32_1 : i32, i32, i32
  }
  func.func @transform_2(%arg0: i32) -> (i32, i32) {
    %c0_i32 = arith.constant 0 : i32
    %c0_i32_0 = arith.constant 0 : i32
    %c0_i32_1 = arith.constant 0 : i32
    return %c0_i32, %c0_i32_0 : i32, i32
  }
  func.func @transform_3(%arg0: i32) -> (i32, i32, i32) {
    %c0_i32 = arith.constant 0 : i32
    %c0_i32_0 = arith.constant 0 : i32
    %c0_i32_1 = arith.constant 0 : i32
    %c0_i32_2 = arith.constant 0 : i32
    return %c0_i32, %c0_i32_0, %c0_i32_1 : i32, i32, i32
  }
  func.func @transform_4(%arg0: i32) -> (i32, i32) {
    %c0_i32 = arith.constant 0 : i32
    %c0_i32_0 = arith.constant 0 : i32
    %c0_i32_1 = arith.constant 0 : i32
    return %c0_i32, %c0_i32_0 : i32, i32
  }
  func.func @transform_5(%arg0: i32) -> (i32, i32, i32) {
    %c0_i32 = arith.constant 0 : i32
    %c0_i32_0 = arith.constant 0 : i32
    %c0_i32_1 = arith.constant 0 : i32
    return %arg0, %c0_i32, %c0_i32_0 : i32, i32, i32
  }
}

</mosaic_0001>

<llo_original>
// kernel: tpu_custom_call.1
$region0: #{tpu_custom_call.1}
  #allocation0 [shape = 'u32[]', space=smem, size = 0x4, offset = 0x4, fixed_abs, tag = 'smem constant byte address 0x4 - core index']
  #allocation1 [shape = 'u32[144,128]{1,0:T(1,128)}', space=vmem, size = 0x12000, scoped, tag = 'internal scratch']
  #allocation2 [shape = 'f32[20,160]{1,0:T(8,128)}', space=vmem, size = 0x6000, scoped, tag = 'scratch operand']
  #allocation3 [shape = 'f32[18,432]{1,0:T(8,128)}', space=vmem, size = 0xc000, scoped, tag = 'scratch operand']
  %s0 = inlined_call_operand.hbm [shape: f32[2,16,128], index: 0, kind: input, shape index: {}]
  %s1 = inlined_call_operand.hbm [shape: f32[5,160,384], index: 1, kind: input, shape index: {}]
  %s2 = inlined_call_operand.hbm [shape: f32[1,384], index: 2, kind: input, shape index: {}]
  %s3 = inlined_call_operand.hbm [shape: f32[3,432,128], index: 3, kind: input, shape index: {}]
  %s4 = inlined_call_operand.hbm [shape: f32[1,128], index: 4, kind: input, shape index: {}]
  %s5 = inlined_call_operand.hbm [shape: f32[2,16,128], index: 5, kind: output, shape index: {}]
  %s6 = sld [smem:[#allocation0]]
  $region73: #{tpu_custom_call.1} parent=0
    _
  %s8 = ssub.s32 1, %s6
  %s9 = scalar_select 0, %s8, %s6
  $region1: #{tpu_custom_call.1} parent=0
    #allocation4 [shape = 'u8[16384]{0}', space=vmem, size = 0x4000, scoped, tag = 'input window, operand 0']
    #allocation5 [shape = 's32[2]{0}', space=sflag, size = 0x8, scoped, tag = 'scoped memory for tpu_custom_call.1']
    #allocation6 [shape = 's32[2]{0}', space=sflag, size = 0x8, scoped, tag = 'scoped memory for tpu_custom_call.1']
    #allocation7 [shape = 'u8[1228800]{0}', space=vmem, size = 0x12c000, scoped, tag = 'input window, operand 1, single buffered']
    #allocation8 [shape = 's32[1]{0}', space=sflag, size = 0x4, scoped, tag = 'scoped memory for tpu_custom_call.1']
    #allocation9 [shape = 'u8[1536]{0}', space=vmem, size = 0x800, scoped, tag = 'input window, operand 2, single buffered']
    #allocation10 [shape = 'u8[663552]{0}', space=vmem, size = 0xa2000, scoped, tag = 'input window, operand 3, single buffered']
    #allocation11 [shape = 's32[1]{0}', space=sflag, size = 0x4, scoped, tag = 'scoped memory for tpu_custom_call.1']
    #allocation12 [shape = 'u8[512]{0}', space=vmem, size = 0x400, scoped, tag = 'input window, operand 4, single buffered']
    #allocation13 [shape = 'u8[16384]{0}', space=vmem, size = 0x4000, scoped, tag = 'output window, operand 0']
    %10 = vsyncpa [#allocation5], 0
    %s11 = scalar_lea.sflag [#allocation5], 1
    %12 = vsyncpa %s11, 0
    %13 = vsyncpa [#allocation8], 0
    %14 = vsyncpa [#allocation11], 0
    %15 = vsyncpa [#allocation6], 0
    %s16 = scalar_lea.sflag [#allocation6], 1
    %17 = vsyncpa %s16, 0
    loop: start=0, step=1, limit=4
    $region2: #{tpu_custom_call.1} parent=1 // loop_pre_header
      _
    $region3: #{tpu_custom_call.1} parent=1 // loop_header
      %s19 = sphi 0, %s23
      %p20 = scmp.ge.s32.totalorder %s19, 4
      %s29 = sphi 0, %s31
      %s32 = sphi 0, %s29
      %s33 = sphi 0, %s32
      %s49 = sphi 0, %s33
      %s53 = sphi 0, %s53
      %s55 = sphi 0, %s53
      %s56 = sphi 0, %s55
      %s70 = sphi 0, %s56
      %s74 = sphi 0, %s74
      %s76 = sphi 0, %s74
      %s77 = sphi 0, %s76
      %s91 = sphi 0, %s77
      %s95 = sphi 0, %s95
      %s97 = sphi 0, %s95
      %s98 = sphi 0, %s97
      %s112 = sphi 0, %s98
      %s116 = sphi 0, %s116
      %s118 = sphi 0, %s116
      %s119 = sphi 0, %s118
      %s133 = sphi 0, %s119
      %s139 = sphi 0, %s141
      %s142 = sphi 0, %s139
      %s143 = sphi 0, %s142
      %s159 = sphi 0, %s143
    $region4: #{tpu_custom_call.1} parent=1 // loop_header_branch
      %22 = sbr.rel (%p20) target = $region8
    $region5: #{tpu_custom_call.1} parent=1 // loop_body
      %s24 = ssub.s32 %s19, 1
      %s25 = ssub.s32 %s19, 2
      %s26 = sadd.s32 %s19, 1
      %s27 = ssub.s32 %s19, %s26
      %p28 = scmp.eq.s32.totalorder %s27, 0
      %s30 = sadd.s32 %s29, 1
      %s31 = scalar_select %p28, %s29, %s30
      %p34 = pneg %p28
      %p35 = scmp.eq.s32.totalorder %s19, 1
      %p36 = por %p34, %p35
      %p37 = scmp.ne.s32.totalorder %s29, %s32
      %p38 = scmp.eq.s32.totalorder %s19, 0
      %p39 = por %p37, %p38
      %p40 = scmp.ne.s32.totalorder %s29, %s32
      %p41 = scmp.eq.s32.totalorder %s24, 1
      %p42 = por %p40, %p41
      %p43 = scmp.ne.s32.totalorder %s32, %s33
      %p44 = scmp.eq.s32.totalorder %s24, 0
      %p45 = por %p43, %p44
      %p46 = scmp.ne.s32.totalorder %s32, %s33
      %p47 = scmp.eq.s32.totalorder %s25, 1
      %p48 = por %p46, %p47
      %p50 = scmp.ne.s32.totalorder %s33, %s49
      %p51 = scmp.eq.s32.totalorder %s25, 0
      %p52 = por %p50, %p51
      %s54 = sadd.s32 %s53, 1
      %p57 = scmp.eq.s32.totalorder %s19, 1
      %p58 = scmp.ne.s32.totalorder %s53, %s55
      %p59 = scmp.eq.s32.totalorder %s19, 0
      %p60 = por %p58, %p59
      %p61 = scmp.ne.s32.totalorder %s53, %s55
      %p62 = scmp.eq.s32.totalorder %s24, 1
      %p63 = por %p61, %p62
      %p64 = scmp.ne.s32.totalorder %s55, %s56
      %p65 = scmp.eq.s32.totalorder %s24, 0
      %p66 = por %p64, %p65
      %p67 = scmp.ne.s32.totalorder %s55, %s56
      %p68 = scmp.eq.s32.totalorder %s25, 1
      %p69 = por %p67, %p68
      %p71 = scmp.ne.s32.totalorder %s56, %s70
      %p72 = scmp.eq.s32.totalorder %s25, 0
      %p73 = por %p71, %p72
      %s75 = sadd.s32 %s74, 1
      %p78 = scmp.eq.s32.totalorder %s19, 1
      %p79 = scmp.ne.s32.totalorder %s74, %s76
      %p80 = scmp.eq.s32.totalorder %s19, 0
      %p81 = por %p79, %p80
      %p82 = scmp.ne.s32.totalorder %s74, %s76
      %p83 = scmp.eq.s32.totalorder %s24, 1
      %p84 = por %p82, %p83
      %p85 = scmp.ne.s32.totalorder %s76, %s77
      %p86 = scmp.eq.s32.totalorder %s24, 0
      %p87 = por %p85, %p86
      %p88 = scmp.ne.s32.totalorder %s76, %s77
      %p89 = scmp.eq.s32.totalorder %s25, 1
      %p90 = por %p88, %p89
      %p92 = scmp.ne.s32.totalorder %s77, %s91
      %p93 = scmp.eq.s32.totalorder %s25, 0
      %p94 = por %p92, %p93
      %s96 = sadd.s32 %s95, 1
      %p99 = scmp.eq.s32.totalorder %s19, 1
      %p100 = scmp.ne.s32.totalorder %s95, %s97
      %p101 = scmp.eq.s32.totalorder %s19, 0
      %p102 = por %p100, %p101
      %p103 = scmp.ne.s32.totalorder %s95, %s97
      %p104 = scmp.eq.s32.totalorder %s24, 1
      %p105 = por %p103, %p104
      %p106 = scmp.ne.s32.totalorder %s97, %s98
      %p107 = scmp.eq.s32.totalorder %s24, 0
      %p108 = por %p106, %p107
      %p109 = scmp.ne.s32.totalorder %s97, %s98
      %p110 = scmp.eq.s32.totalorder %s25, 1
      %p111 = por %p109, %p110
      %p113 = scmp.ne.s32.totalorder %s98, %s112
      %p114 = scmp.eq.s32.totalorder %s25, 0
      %p115 = por %p113, %p114
      %s117 = sadd.s32 %s116, 1
      %p120 = scmp.eq.s32.totalorder %s19, 1
      %p121 = scmp.ne.s32.totalorder %s116, %s118
      %p122 = scmp.eq.s32.totalorder %s19, 0
      %p123 = por %p121, %p122
      %p124 = scmp.ne.s32.totalorder %s116, %s118
      %p125 = scmp.eq.s32.totalorder %s24, 1
      %p126 = por %p124, %p125
      %p127 = scmp.ne.s32.totalorder %s118, %s119
      %p128 = scmp.eq.s32.totalorder %s24, 0
      %p129 = por %p127, %p128
      %p130 = scmp.ne.s32.totalorder %s118, %s119
      %p131 = scmp.eq.s32.totalorder %s25, 1
      %p132 = por %p130, %p131
      %p134 = scmp.ne.s32.totalorder %s119, %s133
      %p135 = scmp.eq.s32.totalorder %s25, 0
      %p136 = por %p134, %p135
      %s137 = ssub.s32 %s19, %s26
      %p138 = scmp.eq.s32.totalorder %s137, 0
      %s140 = sadd.s32 %s139, 1
      %s141 = scalar_select %p138, %s139, %s140
      %p144 = pneg %p138
      %p145 = scmp.eq.s32.totalorder %s19, 1
      %p146 = por %p144, %p145
      %p147 = scmp.ne.s32.totalorder %s139, %s142
      %p148 = scmp.eq.s32.totalorder %s19, 0
      %p149 = por %p147, %p148
      %p150 = scmp.ne.s32.totalorder %s139, %s142
      %p151 = scmp.eq.s32.totalorder %s24, 1
      %p152 = por %p150, %p151
      %p153 = scmp.ne.s32.totalorder %s142, %s143
      %p154 = scmp.eq.s32.totalorder %s24, 0
      %p155 = por %p153, %p154
      %p156 = scmp.ne.s32.totalorder %s142, %s143
      %p157 = scmp.eq.s32.totalorder %s25, 1
      %p158 = por %p156, %p157
      %p160 = scmp.ne.s32.totalorder %s143, %s159
      %p161 = scmp.eq.s32.totalorder %s25, 0
      %p162 = por %p160, %p161
      %p163 = scmp.le.s32.totalorder 1, %s19
      %p164 = scmp.lt.s32.totalorder %s19, 3
      %p165 = pnand %p163, %p164
      %p166 = pneg %p165
      // Predicated region
      $region9: #{tpu_custom_call.1} parent=5 // pred_check
        _
      $region10: #{tpu_custom_call.1} parent=5 // pred_check_branch
        %168 = sbr.rel (%p165) target = $region12
      $region11: #{tpu_custom_call.1} parent=5 // pred_region
        %s169 = ssub.s32 %s19, 1
        // Predicated region
        $region13: #{tpu_custom_call.1} parent=11 // pred_check
          %p170 = pneg %p66
        $region14: #{tpu_custom_call.1} parent=11 // pred_check_branch
          %172 = sbr.rel (%p170) target = $region16
        $region15: #{tpu_custom_call.1} parent=11 // pred_region
          %s174 = ssub.s32 38400, 38400
          %175 = vsyncadd [#allocation8], %s174
          %s176 = sshll.u32 [#allocation7], 4
          %s177 = int_to_ptr.vmem [resolvable:$true] %s176
          %182 = dma.hbm_to_vmem [thread:$0]  %s1, 38400, %s177, [#allocation8], 384, 384, 24
        $region16: #{tpu_custom_call.1} parent=11 // pred_fallthru
          _
        // Predicated region
        $region17: #{tpu_custom_call.1} parent=11 // pred_check
          %p183 = pneg %p87
        $region18: #{tpu_custom_call.1} parent=11 // pred_check_branch
          %185 = sbr.rel (%p183) target = $region20
        $region19: #{tpu_custom_call.1} parent=11 // pred_region
          %s187 = ssub.s32 48, 48
          %188 = vsyncadd [#allocation8], %s187
          %s190 = sshll.u32 [#allocation9], 4
          %s191 = int_to_ptr.vmem [resolvable:$true] %s190
          %193 = dma.hbm_to_vmem [thread:$0]  %s2, 48, %s191, [#allocation8]
        $region20: #{tpu_custom_call.1} parent=11 // pred_fallthru
          _
        // Predicated region
        $region21: #{tpu_custom_call.1} parent=11 // pred_check
          %p194 = pneg %p108
        $region22: #{tpu_custom_call.1} parent=11 // pred_check_branch
          %196 = sbr.rel (%p194) target = $region24
        $region23: #{tpu_custom_call.1} parent=11 // pred_region
          %s198 = ssub.s32 20736, 20736
          %199 = vsyncadd [#allocation11], %s198
          %s200 = sshll.u32 [#allocation10], 4
          %s201 = int_to_ptr.vmem [resolvable:$true] %s200
          %206 = dma.hbm_to_vmem [thread:$0]  %s3, 20736, %s201, [#allocation11], 128, 128, 8
        $region24: #{tpu_custom_call.1} parent=11 // pred_fallthru
          _
        // Predicated region
        $region25: #{tpu_custom_call.1} parent=11 // pred_check
          %p207 = pneg %p129
        $region26: #{tpu_custom_call.1} parent=11 // pred_check_branch
          %209 = sbr.rel (%p207) target = $region28
        $region27: #{tpu_custom_call.1} parent=11 // pred_region
          %s211 = ssub.s32 16, 16
          %212 = vsyncadd [#allocation11], %s211
          %s214 = sshll.u32 [#allocation12], 4
          %s215 = int_to_ptr.vmem [resolvable:$true] %s214
          %217 = dma.hbm_to_vmem [thread:$0]  %s4, 16, %s215, [#allocation11]
        $region28: #{tpu_custom_call.1} parent=11 // pred_fallthru
          _
      $region12: #{tpu_custom_call.1} parent=5 // pred_fallthru
        _
      %p218 = scmp.lt.s32.totalorder %s19, 2
      // Predicated region
      $region29: #{tpu_custom_call.1} parent=5 // pred_check
        %p219 = pneg %p218
      $region30: #{tpu_custom_call.1} parent=5 // pred_check_branch
        %221 = sbr.rel (%p219) target = $region32
      $region31: #{tpu_custom_call.1} parent=5 // pred_region
        // Predicated region
        $region33: #{tpu_custom_call.1} parent=31 // pred_check
          %p222 = pneg %p39
        $region34: #{tpu_custom_call.1} parent=31 // pred_check_branch
          %224 = sbr.rel (%p222) target = $region36
        $region35: #{tpu_custom_call.1} parent=31 // pred_region
          %s225 = sand.u32 %s29, 1
          %s226 = scalar_lea.sflag [#allocation5], %s225
          %s227 = sand.u32 %s29, 1
          %s228 = smul.addr %s227, 16
          %s229 = scalar_lea.vmem [#allocation4], %s228
          %s231 = ssub.s32 256, 256
          %232 = vsyncadd %s226, %s231
          %s233 = smul.addr %s19, 2
          %s234 = smul.addr %s233, 128
          %s235 = scalar_lea.hbm %s0, %s234
          %s236 = sshll.u32 %s229, 4
          %s237 = int_to_ptr.vmem [resolvable:$true] %s236
          %242 = dma.hbm_to_vmem [thread:$0]  %s235, 256, %s237, %s226, 128, 128, 8
        $region36: #{tpu_custom_call.1} parent=31 // pred_fallthru
          _
      $region32: #{tpu_custom_call.1} parent=5 // pred_fallthru
        _
      %p243 = scmp.le.s32.totalorder 1, %s19
      %p244 = scmp.lt.s32.totalorder %s19, 3
      %p245 = pnand %p243, %p244
      %p246 = pneg %p245
      // Predicated region
      $region37: #{tpu_custom_call.1} parent=5 // pred_check
        _
      $region38: #{tpu_custom_call.1} parent=5 // pred_check_branch
        %248 = sbr.rel (%p245) target = $region40
      $region39: #{tpu_custom_call.1} parent=5 // pred_region
        %s249 = ssub.s32 %s19, 1
        %s250 = sand.u32 %s32, 1
        %s251 = scalar_lea.sflag [#allocation5], %s250
        %s252 = sand.u32 %s32, 1
        %s253 = smul.addr %s252, 16
        %s254 = scalar_lea.vmem [#allocation4], %s253
        // Predicated region
        $region41: #{tpu_custom_call.1} parent=39 // pred_check
          %p255 = pneg %p45
        $region42: #{tpu_custom_call.1} parent=39 // pred_check_branch
          %257 = sbr.rel (%p255) target = $region44
        $region43: #{tpu_custom_call.1} parent=39 // pred_region
          %258 = dma.done %s251, 256
        $region44: #{tpu_custom_call.1} parent=39 // pred_fallthru
          _
        // Predicated region
        $region45: #{tpu_custom_call.1} parent=39 // pred_check
          %p259 = pneg %p66
        $region46: #{tpu_custom_call.1} parent=39 // pred_check_branch
          %261 = sbr.rel (%p259) target = $region48
        $region47: #{tpu_custom_call.1} parent=39 // pred_region
          %262 = dma.done [#allocation8], 38400
        $region48: #{tpu_custom_call.1} parent=39 // pred_fallthru
          _
        // Predicated region
        $region49: #{tpu_custom_call.1} parent=39 // pred_check
          %p263 = pneg %p87
        $region50: #{tpu_custom_call.1} parent=39 // pred_check_branch
          %265 = sbr.rel (%p263) target = $region52
        $region51: #{tpu_custom_call.1} parent=39 // pred_region
          %266 = dma.done [#allocation8], 48
        $region52: #{tpu_custom_call.1} parent=39 // pred_fallthru
          _
        // Predicated region
        $region53: #{tpu_custom_call.1} parent=39 // pred_check
          %p267 = pneg %p108
        $region54: #{tpu_custom_call.1} parent=39 // pred_check_branch
          %269 = sbr.rel (%p267) target = $region56
        $region55: #{tpu_custom_call.1} parent=39 // pred_region
          %270 = dma.done [#allocation11], 20736
        $region56: #{tpu_custom_call.1} parent=39 // pred_fallthru
          _
        // Predicated region
        $region57: #{tpu_custom_call.1} parent=39 // pred_check
          %p271 = pneg %p129
        $region58: #{tpu_custom_call.1} parent=39 // pred_check_branch
          %273 = sbr.rel (%p271) target = $region60
        $region59: #{tpu_custom_call.1} parent=39 // pred_region
          %274 = dma.done [#allocation11], 16
        $region60: #{tpu_custom_call.1} parent=39 // pred_fallthru
          _
        %s275 = sand.u32 %s32, 1
        %s276 = scalar_lea.sflag [#allocation5], %s275
        %s277 = sand.u32 %s32, 1
        %s278 = smul.addr %s277, 16
        %s279 = scalar_lea.vmem [#allocation4], %s278
        %p280 = pneg %p45
        %p281 = pneg %p42
        %p282 = pneg %p66
        %p283 = pneg %p63
        %p284 = pneg %p87
        %p285 = pneg %p84
        %p286 = pneg %p108
        %p287 = pneg %p105
        %p288 = pneg %p129
        %p289 = pneg %p126
        %p290 = pneg %p155
        %p291 = pneg %p152
        %s292 = sand.u32 %s142, 1
        %s293 = scalar_lea.sflag [#allocation6], %s292
        %s294 = sand.u32 %s142, 1
        %s295 = smul.addr %s294, 16
        %s296 = scalar_lea.vmem [#allocation13], %s295
        %297 = vst [vmem:[#allocation2] sm:$0xff] 0.0
        %vm298 = vcmask 261120
        %299 = vst.msk [vmem:[#allocation2 + $0x8] sm:$0xff] %vm298, 0.0
        %300 = vst [vmem:[#allocation2 + $0x10] sm:$0xff] 0.0
        %301 = vst.msk [vmem:[#allocation2 + $0x18] sm:$0xff] %vm298, 0.0
        %302 = vst [vmem:[#allocation2 + $0x20] sm:$0xf] 0.0
        %vm303 = vcmask 257024
        %304 = vst.msk [vmem:[#allocation2 + $0x28] sm:$0xf] %vm303, 0.0
        %v305 = vld [vmem:[%s254] sm:$0xff]
        %v306 = vld [vmem:[%s254 + $0x8] sm:$0xff]
        %vm309 = vcmask 1041408
        %v310 = vrot.slane %v305, 6
        %v311 = vrot.slane %v306, 6
        %v312 = vsel %vm309, %v310, %v311
        %313 = vrot.lane.b32.xlu0 %v310, 16
        %v314 = vpop.permute.xlu0 %313
        %315 = vrot.lane.b32.xlu0 %v312, 16
        %v316 = vpop.permute.xlu0 %315
        %317 = vrot.lane.b32.xlu0 %v311, 16
        %v318 = vpop.permute.xlu0 %317
        %vm322 = vcmask 1047682
        %323 = vst.msk [vmem:[#allocation2] sm:$0xfc] %vm322, %v314
        %vm324 = vcmask 130050
        %325 = vst.msk [vmem:[#allocation2 + $0x8] sm:$0xfc] %vm324, %v314
        %vm326 = vcmask 1047680
        %327 = vst.msk [vmem:[#allocation2 + $0x10] sm:$0xff] %vm326, %v316
        %vm328 = vcmask 130048
        %329 = vst.msk [vmem:[#allocation2 + $0x18] sm:$0xff] %vm328, %v316
        %vm330 = vcmask 1041536
        %331 = vst.msk [vmem:[#allocation2 + $0x20] sm:$0x3] %vm330, %v318
        %vm332 = vcmask 123904
        %333 = vst.msk [vmem:[#allocation2 + $0x28] sm:$0x3] %vm332, %v318
        %v334 = vld [vmem:[#allocation2] sm:$0xff]
        %v335 = vld [vmem:[#allocation2 + $0x8] sm:$0xff]
        %v336 = vld [vmem:[#allocation2 + $0x10] sm:$0xff]
        %v337 = vld [vmem:[#allocation2 + $0x18] sm:$0xff]
        %v338 = vld [vmem:[#allocation7] sm:$0xff]
        %v339 = vld [vmem:[#allocation7 + $0x8] sm:$0xff]
        %v340 = vld [vmem:[#allocation7 + $0x10] sm:$0xff]
        %v341 = vld [vmem:[#allocation7 + $0x18] sm:$0xff]
        %v342 = vld [vmem:[#allocation7 + $0x20] sm:$0xff]
        %v343 = vld [vmem:[#allocation7 + $0x28] sm:$0xff]
        %v344 = vld [vmem:[#allocation7 + $0x30] sm:$0xff]
        %v345 = vld [vmem:[#allocation7 + $0x38] sm:$0xff]
        %v346 = vld [vmem:[#allocation7 + $0x40] sm:$0xff]
        %v347 = vld [vmem:[#allocation7 + $0x48] sm:$0xff]
        %v348 = vld [vmem:[#allocation7 + $0x50] sm:$0xff]
        %v349 = vld [vmem:[#allocation7 + $0x58] sm:$0xff]
        %v350 = vld [vmem:[#allocation7 + $0x60] sm:$0xff]
        %v351 = vld [vmem:[#allocation7 + $0x68] sm:$0xff]
        %v352 = vld [vmem:[#allocation7 + $0x70] sm:$0xff]
        %v353 = vld [vmem:[#allocation7 + $0x78] sm:$0xff]
        %v354 = vld [vmem:[#allocation7 + $0x80] sm:$0xff]
        %v355 = vld [vmem:[#allocation7 + $0x88] sm:$0xff]
        %v356 = vld [vmem:[#allocation7 + $0x90] sm:$0xff]
        %v357 = vld [vmem:[#allocation7 + $0x98] sm:$0xff]
        %v358 = vld [vmem:[#allocation7 + $0xa0] sm:$0xff]
        %v359 = vld [vmem:[#allocation7 + $0xa8] sm:$0xff]
        %v360 = vld [vmem:[#allocation7 + $0xb0] sm:$0xff]
        %v361 = vld [vmem:[#allocation7 + $0xb8] sm:$0xff]
        %v362 = vld [vmem:[#allocation7 + $0xc0] sm:$0xff]
        %v363 = vld [vmem:[#allocation7 + $0xc8] sm:$0xff]
        %v364 = vld [vmem:[#allocation7 + $0xd0] sm:$0xff]
        %v365 = vld [vmem:[#allocation7 + $0xd8] sm:$0xff]
        %v366 = vld [vmem:[#allocation7 + $0xe0] sm:$0xff]
        %v367 = vld [vmem:[#allocation7 + $0xe8] sm:$0xff]
        %v368 = vld [vmem:[#allocation7 + $0xf0] sm:$0xff]
        %v369 = vld [vmem:[#allocation7 + $0xf8] sm:$0xff]
        %v370 = vld [vmem:[#allocation7 + $0x100] sm:$0xff]
        %v371 = vld [vmem:[#allocation7 + $0x108] sm:$0xff]
        %v372 = vld [vmem:[#allocation7 + $0x110] sm:$0xff]
        %v373 = vld [vmem:[#allocation7 + $0x118] sm:$0xff]
        %v374 = vld [vmem:[#allocation7 + $0x120] sm:$0xff]
        %v375 = vld [vmem:[#allocation7 + $0x128] sm:$0xff]
        %v376 = vld [vmem:[#allocation7 + $0x130] sm:$0xff]
        %v377 = vld [vmem:[#allocation7 + $0x138] sm:$0xff]
        %v378 = vld [vmem:[#allocation7 + $0x140] sm:$0xff]
        %v379 = vld [vmem:[#allocation7 + $0x148] sm:$0xff]
        %v380 = vld [vmem:[#allocation7 + $0x150] sm:$0xff]
        %v381 = vld [vmem:[#allocation7 + $0x158] sm:$0xff]
        %v382 = vld [vmem:[#allocation7 + $0x160] sm:$0xff]
        %v383 = vld [vmem:[#allocation7 + $0x168] sm:$0xff]
        %v384 = vld [vmem:[#allocation7 + $0x170] sm:$0xff]
        %v385 = vld [vmem:[#allocation7 + $0x178] sm:$0xff]
        %v386 = vld [vmem:[#allocation7 + $0x180] sm:$0xff]
        %v387 = vld [vmem:[#allocation7 + $0x188] sm:$0xff]
        %v388 = vld [vmem:[#allocation7 + $0x190] sm:$0xff]
        %v389 = vld [vmem:[#allocation7 + $0x198] sm:$0xff]
        %v390 = vld [vmem:[#allocation7 + $0x1a0] sm:$0xff]
        %v391 = vld [vmem:[#allocation7 + $0x1a8] sm:$0xff]
        %v392 = vld [vmem:[#allocation7 + $0x1b0] sm:$0xff]
        %v393 = vld [vmem:[#allocation7 + $0x1b8] sm:$0xff]
        %v394 = vld [vmem:[#allocation7 + $0x1c0] sm:$0xff]
        %v395 = vld [vmem:[#allocation7 + $0x1c8] sm:$0xff]
        %v396 = vld [vmem:[#allocation7 + $0x1d0] sm:$0xff]
        %v397 = vld [vmem:[#allocation7 + $0x1d8] sm:$0xff]
        %v398 = vld [vmem:[#allocation2] sm:$0xfe]
        %v399 = vld [vmem:[#allocation2 + $0x8] sm:$0xfe]
        %v400 = vld [vmem:[#allocation2 + $0x20] sm:$0x1]
        %v401 = vld [vmem:[#allocation2 + $0x28] sm:$0x1]
        %s402 = scalar_lea.vmem [#allocation7], 480
        %v403 = vld [vmem:[%s402] sm:$0xff]
        %v404 = vld [vmem:[%s402 + $0x8] sm:$0xff]
        %v405 = vld [vmem:[%s402 + $0x10] sm:$0xff]
        %v406 = vld [vmem:[%s402 + $0x18] sm:$0xff]
        %v407 = vld [vmem:[%s402 + $0x20] sm:$0xff]
        %v408 = vld [vmem:[%s402 + $0x28] sm:$0xff]
        %v409 = vld [vmem:[%s402 + $0x30] sm:$0xff]
        %v410 = vld [vmem:[%s402 + $0x38] sm:$0xff]
        %v411 = vld [vmem:[%s402 + $0x40] sm:$0xff]
        %v412 = vld [vmem:[%s402 + $0x48] sm:$0xff]
        %v413 = vld [vmem:[%s402 + $0x50] sm:$0xff]
        %v414 = vld [vmem:[%s402 + $0x58] sm:$0xff]
        %v415 = vld [vmem:[%s402 + $0x60] sm:$0xff]
        %v416 = vld [vmem:[%s402 + $0x68] sm:$0xff]
        %v417 = vld [vmem:[%s402 + $0x70] sm:$0xff]
        %v418 = vld [vmem:[%s402 + $0x78] sm:$0xff]
        %v419 = vld [vmem:[%s402 + $0x80] sm:$0xff]
        %v420 = vld [vmem:[%s402 + $0x88] sm:$0xff]
        %v421 = vld [vmem:[%s402 + $0x90] sm:$0xff]
        %v422 = vld [vmem:[%s402 + $0x98] sm:$0xff]
        %v423 = vld [vmem:[%s402 + $0xa0] sm:$0xff]
        %v424 = vld [vmem:[%s402 + $0xa8] sm:$0xff]
        %v425 = vld [vmem:[%s402 + $0xb0] sm:$0xff]
        %v426 = vld [vmem:[%s402 + $0xb8] sm:$0xff]
        %v427 = vld [vmem:[%s402 + $0xc0] sm:$0xff]
        %v428 = vld [vmem:[%s402 + $0xc8] sm:$0xff]
        %v429 = vld [vmem:[%s402 + $0xd0] sm:$0xff]
        %v430 = vld [vmem:[%s402 + $0xd8] sm:$0xff]
        %v431 = vld [vmem:[%s402 + $0xe0] sm:$0xff]
        %v432 = vld [vmem:[%s402 + $0xe8] sm:$0xff]
        %v433 = vld [vmem:[%s402 + $0xf0] sm:$0xff]
        %v434 = vld [vmem:[%s402 + $0xf8] sm:$0xff]
        %v435 = vld [vmem:[%s402 + $0x100] sm:$0xff]
        %v436 = vld [vmem:[%s402 + $0x108] sm:$0xff]
        %v437 = vld [vmem:[%s402 + $0x110] sm:$0xff]
        %v438 = vld [vmem:[%s402 + $0x118] sm:$0xff]
        %v439 = vld [vmem:[%s402 + $0x120] sm:$0xff]
        %v440 = vld [vmem:[%s402 + $0x128] sm:$0xff]
        %v441 = vld [vmem:[%s402 + $0x130] sm:$0xff]
        %v442 = vld [vmem:[%s402 + $0x138] sm:$0xff]
        %v443 = vld [vmem:[%s402 + $0x140] sm:$0xff]
        %v444 = vld [vmem:[%s402 + $0x148] sm:$0xff]
        %v445 = vld [vmem:[%s402 + $0x150] sm:$0xff]
        %v446 = vld [vmem:[%s402 + $0x158] sm:$0xff]
        %v447 = vld [vmem:[%s402 + $0x160] sm:$0xff]
        %v448 = vld [vmem:[%s402 + $0x168] sm:$0xff]
        %v449 = vld [vmem:[%s402 + $0x170] sm:$0xff]
        %v450 = vld [vmem:[%s402 + $0x178] sm:$0xff]
        %v451 = vld [vmem:[%s402 + $0x180] sm:$0xff]
        %v452 = vld [vmem:[%s402 + $0x188] sm:$0xff]
        %v453 = vld [vmem:[%s402 + $0x190] sm:$0xff]
        %v454 = vld [vmem:[%s402 + $0x198] sm:$0xff]
        %v455 = vld [vmem:[%s402 + $0x1a0] sm:$0xff]
        %v456 = vld [vmem:[%s402 + $0x1a8] sm:$0xff]
        %v457 = vld [vmem:[%s402 + $0x1b0] sm:$0xff]
        %v458 = vld [vmem:[%s402 + $0x1b8] sm:$0xff]
        %v459 = vld [vmem:[%s402 + $0x1c0] sm:$0xff]
        %v460 = vld [vmem:[%s402 + $0x1c8] sm:$0xff]
        %v461 = vld [vmem:[%s402 + $0x1d0] sm:$0xff]
        %v462 = vld [vmem:[%s402 + $0x1d8] sm:$0xff]
        %vm469 = vcmask 1046528
        %v470 = vrot.slane %v398, 1
        %v471 = vrot.slane %v336, 1
        %v472 = vsel %vm469, %v470, %v471
        %v473 = vrot.slane %v399, 1
        %v474 = vrot.slane %v337, 1
        %v475 = vsel %vm469, %v473, %v474
        %v476 = vrot.slane %v400, 1
        %v477 = vsel %vm469, %v471, %v476
        %v478 = vrot.slane %v401, 1
        %v479 = vsel %vm469, %v474, %v478
        %v482 = vsel %vm298, %v475, 0
        %v484 = vsel %vm298, %v479, 0
        %486 = vmatprep.subr.mxu0 %v449
        %487 = vmatpush1.msra.mxu0 %v448
        %488 = vmatprep.subr.mxu0 %v446
        %489 = vmatpush1.msra.mxu0 %v445
        %490 = vmatprep.subr.mxu0 %v443
        %491 = vmatpush1.msra.mxu0 %v442
        %492 = vmatprep.subr.mxu0 %v440
        %493 = vmatpush1.msra.mxu0 %v439
        %494 = vmatprep.subr.mxu0 %v437
        %495 = vmatpush1.msra.mxu0 %v436
        %496 = vmatprep.subr.mxu0 %v434
        %497 = vmatpush1.msra.mxu0 %v433
        %498 = vmatprep.subr.mxu0 %v431
        %499 = vmatpush1.msra.mxu0 %v430
        %500 = vmatprep.subr.mxu0 %v428
        %501 = vmatpush1.msra.mxu0 %v427
        %502 = vmatprep.subr.mxu0 %v425
        %503 = vmatpush1.msra.mxu0 %v424
        %504 = vmatprep.subr.mxu0 %v422
        %505 = vmatpush1.msra.mxu0 %v421
        %506 = vmatprep.subr.mxu0 %v419
        %507 = vmatpush1.msra.mxu0 %v418
        %508 = vmatprep.subr.mxu0 %v416
        %509 = vmatpush1.msra.mxu0 %v415
        %510 = vmatprep.subr.mxu0 %v413
        %511 = vmatpush1.msra.mxu0 %v412
        %512 = vmatprep.subr.mxu0 %v410
        %513 = vmatpush1.msra.mxu0 %v409
        %514 = vmatprep.subr.mxu0 %v407
        %515 = vmatpush1.msra.mxu0 %v406
        %516 = vmatprep.subr.mxu0 %v404
        %517 = vmatpush1.msra.mxu0 %v403
        %518 = vmatprep.subr.mxu0 0.0
        %519 = vmatpush2.msra.mxu0 0.0
        %520 = vmatprep.subr.mxu0 0.0
        %521 = vmatpush2.msra.mxu0 0.0
        %522 = vmatprep.subr.mxu0 0.0
        %523 = vmatpush2.msra.mxu0 0.0
        %524 = vmatprep.subr.mxu0 0.0
        %525 = vmatpush2.msra.mxu0 0.0
        %526 = vmatprep.subr.mxu0 0.0
        %527 = vmatpush2.msra.mxu0 0.0
        %528 = vmatprep.subr.mxu0 0.0
        %529 = vmatpush2.msra.mxu0 0.0
        %530 = vmatprep.subr.mxu0 0.0
        %531 = vmatpush2.msra.mxu0 0.0
        %532 = vmatprep.subr.mxu0 0.0
        %533 = vmatpush2.msra.mxu0 0.0
        %534 = vmatprep.subr.mxu0 0.0
        %535 = vmatpush2.msra.mxu0 0.0
        %536 = vmatprep.subr.mxu0 0.0
        %537 = vmatpush2.msra.mxu0 0.0
        %538 = vmatprep.subr.mxu0 0.0
        %539 = vmatpush2.msra.mxu0 0.0
        %540 = vmatprep.subr.mxu0 0.0
        %541 = vmatpush2.msra.mxu0 0.0
        %542 = vmatprep.subr.mxu0 %v461
        %543 = vmatpush2.msra.mxu0 %v460
        %544 = vmatprep.subr.mxu0 %v458
        %545 = vmatpush2.msra.mxu0 %v457
        %546 = vmatprep.subr.mxu0 %v455
        %547 = vmatpush2.msra.mxu0 %v454
        %548 = vmatprep.subr.mxu0 %v452
        %549 = vmatpush2.msra.mxu0 %v451
        %550 = vmatprep.mubr.f32.mxu0 %v482
        %551 = vmatmul.mubr.f32.gmra.mxu0 %v472
        %v552 = vpop.f32.mrf.mxu0
        %v553 = vadd.f32 0.0, %v552
        %v554 = vpop.f32.mrf.mxu0
        %v555 = vadd.f32 0.0, %v554
        %556 = vmatprep.mubr.f32.mxu0 %v484
        %557 = vmatmul.mubr.f32.gmra.mxu0 %v477
        %v558 = vpop.f32.mrf.mxu0
        %v559 = vadd.f32 0.0, %v558
        %v560 = vpop.f32.mrf.mxu0
        %v561 = vadd.f32 0.0, %v560
        %562 = vdwg.mxu0
        %563 = vmatprep.subr.mxu0 0.0
        %564 = vmatpush1.msra.mxu0 %v450
        %565 = vmatprep.subr.mxu0 0.0
        %566 = vmatpush1.msra.mxu0 %v447
        %567 = vmatprep.subr.mxu0 0.0
        %568 = vmatpush1.msra.mxu0 %v444
        %569 = vmatprep.subr.mxu0 0.0
        %570 = vmatpush1.msra.mxu0 %v441
        %571 = vmatprep.subr.mxu0 0.0
        %572 = vmatpush1.msra.mxu0 %v438
        %573 = vmatprep.subr.mxu0 0.0
        %574 = vmatpush1.msra.mxu0 %v435
        %575 = vmatprep.subr.mxu0 0.0
        %576 = vmatpush1.msra.mxu0 %v432
        %577 = vmatprep.subr.mxu0 0.0
        %578 = vmatpush1.msra.mxu0 %v429
        %579 = vmatprep.subr.mxu0 0.0
        %580 = vmatpush1.msra.mxu0 %v426
        %581 = vmatprep.subr.mxu0 0.0
        %582 = vmatpush1.msra.mxu0 %v423
        %583 = vmatprep.subr.mxu0 0.0
        %584 = vmatpush1.msra.mxu0 %v420
        %585 = vmatprep.subr.mxu0 0.0
        %586 = vmatpush1.msra.mxu0 %v417
        %587 = vmatprep.subr.mxu0 0.0
        %588 = vmatpush1.msra.mxu0 %v414
        %589 = vmatprep.subr.mxu0 0.0
        %590 = vmatpush1.msra.mxu0 %v411
        %591 = vmatprep.subr.mxu0 0.0
        %592 = vmatpush1.msra.mxu0 %v408
        %593 = vmatprep.subr.mxu0 0.0
        %594 = vmatpush1.msra.mxu0 %v405
        %595 = vmatprep.subr.mxu0 0.0
        %596 = vmatpush2.msra.mxu0 0.0
        %597 = vmatprep.subr.mxu0 0.0
        %598 = vmatpush2.msra.mxu0 0.0
        %599 = vmatprep.subr.mxu0 0.0
        %600 = vmatpush2.msra.mxu0 0.0
        %601 = vmatprep.subr.mxu0 0.0
        %602 = vmatpush2.msra.mxu0 0.0
        %603 = vmatprep.subr.mxu0 0.0
        %604 = vmatpush2.msra.mxu0 0.0
        %605 = vmatprep.subr.mxu0 0.0
        %606 = vmatpush2.msra.mxu0 0.0
        %607 = vmatprep.subr.mxu0 0.0
        %608 = vmatpush2.msra.mxu0 0.0
        %609 = vmatprep.subr.mxu0 0.0
        %610 = vmatpush2.msra.mxu0 0.0
        %611 = vmatprep.subr.mxu0 0.0
        %612 = vmatpush2.msra.mxu0 0.0
        %613 = vmatprep.subr.mxu0 0.0
        %614 = vmatpush2.msra.mxu0 0.0
        %615 = vmatprep.subr.mxu0 0.0
        %616 = vmatpush2.msra.mxu0 0.0
        %617 = vmatprep.subr.mxu0 0.0
        %618 = vmatpush2.msra.mxu0 0.0
        %619 = vmatprep.subr.mxu0 0.0
        %620 = vmatpush2.msra.mxu0 %v462
        %621 = vmatprep.subr.mxu0 0.0
        %622 = vmatpush2.msra.mxu0 %v459
        %623 = vmatprep.subr.mxu0 0.0
        %624 = vmatpush2.msra.mxu0 %v456
        %625 = vmatprep.subr.mxu0 0.0
        %626 = vmatpush2.msra.mxu0 %v453
        %627 = vmatprep.mubr.f32.mxu0 %v482
        %628 = vmatmul.mubr.f32.gmra.mxu0 %v472
        %v629 = vpop.f32.mrf.mxu0
        %v630 = vadd.f32 0.0, %v629
        %v631 = vpop.f32.mrf.mxu0
        %632 = vmatprep.mubr.f32.mxu0 %v484
        %633 = vmatmul.mubr.f32.gmra.mxu0 %v477
        %v634 = vpop.f32.mrf.mxu0
        %v635 = vadd.f32 0.0, %v634
        %v636 = vpop.f32.mrf.mxu0
        %637 = vdwg.mxu0
        %v639 = vsel %vm298, %v335, 0
        %v641 = vsel %vm298, %v337, 0
        %643 = vmatprep.subr.mxu0 %v384
        %644 = vmatpush1.msra.mxu0 %v383
        %645 = vmatprep.subr.mxu0 %v381
        %646 = vmatpush1.msra.mxu0 %v380
        %647 = vmatprep.subr.mxu0 %v378
        %648 = vmatpush1.msra.mxu0 %v377
        %649 = vmatprep.subr.mxu0 %v375
        %650 = vmatpush1.msra.mxu0 %v374
        %651 = vmatprep.subr.mxu0 %v372
        %652 = vmatpush1.msra.mxu0 %v371
        %653 = vmatprep.subr.mxu0 %v369
        %654 = vmatpush1.msra.mxu0 %v368
        %655 = vmatprep.subr.mxu0 %v366
        %656 = vmatpush1.msra.mxu0 %v365
        %657 = vmatprep.subr.mxu0 %v363
        %658 = vmatpush1.msra.mxu0 %v362
        %659 = vmatprep.subr.mxu0 %v360
        %660 = vmatpush1.msra.mxu0 %v359
        %661 = vmatprep.subr.mxu0 %v357
        %662 = vmatpush1.msra.mxu0 %v356
        %663 = vmatprep.subr.mxu0 %v354
        %664 = vmatpush1.msra.mxu0 %v353
        %665 = vmatprep.subr.mxu0 %v351
        %666 = vmatpush1.msra.mxu0 %v350
        %667 = vmatprep.subr.mxu0 %v348
        %668 = vmatpush1.msra.mxu0 %v347
        %669 = vmatprep.subr.mxu0 %v345
        %670 = vmatpush1.msra.mxu0 %v344
        %671 = vmatprep.subr.mxu0 %v342
        %672 = vmatpush1.msra.mxu0 %v341
        %673 = vmatprep.subr.mxu0 %v339
        %674 = vmatpush1.msra.mxu0 %v338
        %675 = vmatprep.subr.mxu0 0.0
        %676 = vmatpush2.msra.mxu0 0.0
        %677 = vmatprep.subr.mxu0 0.0
        %678 = vmatpush2.msra.mxu0 0.0
        %679 = vmatprep.subr.mxu0 0.0
        %680 = vmatpush2.msra.mxu0 0.0
        %681 = vmatprep.subr.mxu0 0.0
        %682 = vmatpush2.msra.mxu0 0.0
        %683 = vmatprep.subr.mxu0 0.0
        %684 = vmatpush2.msra.mxu0 0.0
        %685 = vmatprep.subr.mxu0 0.0
        %686 = vmatpush2.msra.mxu0 0.0
        %687 = vmatprep.subr.mxu0 0.0
        %688 = vmatpush2.msra.mxu0 0.0
        %689 = vmatprep.subr.mxu0 0.0
        %690 = vmatpush2.msra.mxu0 0.0
        %691 = vmatprep.subr.mxu0 0.0
        %692 = vmatpush2.msra.mxu0 0.0
        %693 = vmatprep.subr.mxu0 0.0
        %694 = vmatpush2.msra.mxu0 0.0
        %695 = vmatprep.subr.mxu0 0.0
        %696 = vmatpush2.msra.mxu0 0.0
        %697 = vmatprep.subr.mxu0 0.0
        %698 = vmatpush2.msra.mxu0 0.0
        %699 = vmatprep.subr.mxu0 %v396
        %700 = vmatpush2.msra.mxu0 %v395
        %701 = vmatprep.subr.mxu0 %v393
        %702 = vmatpush2.msra.mxu0 %v392
        %703 = vmatprep.subr.mxu0 %v390
        %704 = vmatpush2.msra.mxu0 %v389
        %705 = vmatprep.subr.mxu0 %v387
        %706 = vmatpush2.msra.mxu0 %v386
        %707 = vmatprep.mubr.f32.mxu0 %v639
        %708 = vmatmul.mubr.f32.gmra.mxu0 %v334
        %v709 = vpop.f32.mrf.mxu0
        %v710 = vadd.f32 %v553, %v709
        %v711 = vpop.f32.mrf.mxu0
        %v712 = vadd.f32 %v555, %v711
        %713 = vmatprep.mubr.f32.mxu0 %v641
        %714 = vmatmul.mubr.f32.gmra.mxu0 %v336
        %v715 = vpop.f32.mrf.mxu0
        %v716 = vadd.f32 %v559, %v715
        %v717 = vpop.f32.mrf.mxu0
        %v718 = vadd.f32 %v561, %v717
        %719 = vdwg.mxu0
        %720 = vmatprep.subr.mxu0 0.0
        %721 = vmatpush1.msra.mxu0 %v385
        %722 = vmatprep.subr.mxu0 0.0
        %723 = vmatpush1.msra.mxu0 %v382
        %724 = vmatprep.subr.mxu0 0.0
        %725 = vmatpush1.msra.mxu0 %v379
        %726 = vmatprep.subr.mxu0 0.0
        %727 = vmatpush1.msra.mxu0 %v376
        %728 = vmatprep.subr.mxu0 0.0
        %729 = vmatpush1.msra.mxu0 %v373
        %730 = vmatprep.subr.mxu0 0.0
        %731 = vmatpush1.msra.mxu0 %v370
        %732 = vmatprep.subr.mxu0 0.0
        %733 = vmatpush1.msra.mxu0 %v367
        %734 = vmatprep.subr.mxu0 0.0
        %735 = vmatpush1.msra.mxu0 %v364
        %736 = vmatprep.subr.mxu0 0.0
        %737 = vmatpush1.msra.mxu0 %v361
        %738 = vmatprep.subr.mxu0 0.0
        %739 = vmatpush1.msra.mxu0 %v358
        %740 = vmatprep.subr.mxu0 0.0
        %741 = vmatpush1.msra.mxu0 %v355
        %742 = vmatprep.subr.mxu0 0.0
        %743 = vmatpush1.msra.mxu0 %v352
        %744 = vmatprep.subr.mxu0 0.0
        %745 = vmatpush1.msra.mxu0 %v349
        %746 = vmatprep.subr.mxu0 0.0
        %747 = vmatpush1.msra.mxu0 %v346
        %748 = vmatprep.subr.mxu0 0.0
        %749 = vmatpush1.msra.mxu0 %v343
        %750 = vmatprep.subr.mxu0 0.0
        %751 = vmatpush1.msra.mxu0 %v340
        %752 = vmatprep.subr.mxu0 0.0
        %753 = vmatpush2.msra.mxu0 0.0
        %754 = vmatprep.subr.mxu0 0.0
        %755 = vmatpush2.msra.mxu0 0.0
        %756 = vmatprep.subr.mxu0 0.0
        %757 = vmatpush2.msra.mxu0 0.0
        %758 = vmatprep.subr.mxu0 0.0
        %759 = vmatpush2.msra.mxu0 0.0
        %760 = vmatprep.subr.mxu0 0.0
        %761 = vmatpush2.msra.mxu0 0.0
        %762 = vmatprep.subr.mxu0 0.0
        %763 = vmatpush2.msra.mxu0 0.0
        %764 = vmatprep.subr.mxu0 0.0
        %765 = vmatpush2.msra.mxu0 0.0
        %766 = vmatprep.subr.mxu0 0.0
        %767 = vmatpush2.msra.mxu0 0.0
        %768 = vmatprep.subr.mxu0 0.0
        %769 = vmatpush2.msra.mxu0 0.0
        %770 = vmatprep.subr.mxu0 0.0
        %771 = vmatpush2.msra.mxu0 0.0
        %772 = vmatprep.subr.mxu0 0.0
        %773 = vmatpush2.msra.mxu0 0.0
        %774 = vmatprep.subr.mxu0 0.0
        %775 = vmatpush2.msra.mxu0 0.0
        %776 = vmatprep.subr.mxu0 0.0
        %777 = vmatpush2.msra.mxu0 %v397
        %778 = vmatprep.subr.mxu0 0.0
        %779 = vmatpush2.msra.mxu0 %v394
        %780 = vmatprep.subr.mxu0 0.0
        %781 = vmatpush2.msra.mxu0 %v391
        %782 = vmatprep.subr.mxu0 0.0
        %783 = vmatpush2.msra.mxu0 %v388
        %784 = vmatprep.mubr.f32.mxu0 %v639
        %785 = vmatmul.mubr.f32.gmra.mxu0 %v334
        %v786 = vpop.f32.mrf.mxu0
        %v787 = vadd.f32 %v630, %v786
        %v788 = vpop.f32.mrf.mxu0
        %789 = vmatprep.mubr.f32.mxu0 %v641
        %790 = vmatmul.mubr.f32.gmra.mxu0 %v336
        %v791 = vpop.f32.mrf.mxu0
        %v792 = vadd.f32 %v635, %v791
        %v793 = vpop.f32.mrf.mxu0
        %794 = vdwg.mxu0
        %v795 = vld [vmem:[#allocation2] sm:$0xfc]
        %v796 = vld [vmem:[#allocation2 + $0x8] sm:$0xfc]
        %v797 = vld [vmem:[#allocation2 + $0x20] sm:$0x3]
        %v798 = vld [vmem:[#allocation2 + $0x28] sm:$0x3]
        %s799 = scalar_lea.vmem [#allocation7], 960
        %v800 = vld [vmem:[%s799] sm:$0xff]
        %v801 = vld [vmem:[%s799 + $0x8] sm:$0xff]
        %v802 = vld [vmem:[%s799 + $0x10] sm:$0xff]
        %v803 = vld [vmem:[%s799 + $0x18] sm:$0xff]
        %v804 = vld [vmem:[%s799 + $0x20] sm:$0xff]
        %v805 = vld [vmem:[%s799 + $0x28] sm:$0xff]
        %v806 = vld [vmem:[%s799 + $0x30] sm:$0xff]
        %v807 = vld [vmem:[%s799 + $0x38] sm:$0xff]
        %v808 = vld [vmem:[%s799 + $0x40] sm:$0xff]
        %v809 = vld [vmem:[%s799 + $0x48] sm:$0xff]
        %v810 = vld [vmem:[%s799 + $0x50] sm:$0xff]
        %v811 = vld [vmem:[%s799 + $0x58] sm:$0xff]
        %v812 = vld [vmem:[%s799 + $0x60] sm:$0xff]
        %v813 = vld [vmem:[%s799 + $0x68] sm:$0xff]
        %v814 = vld [vmem:[%s799 + $0x70] sm:$0xff]
        %v815 = vld [vmem:[%s799 + $0x78] sm:$0xff]
        %v816 = vld [vmem:[%s799 + $0x80] sm:$0xff]
        %v817 = vld [vmem:[%s799 + $0x88] sm:$0xff]
        %v818 = vld [vmem:[%s799 + $0x90] sm:$0xff]
        %v819 = vld [vmem:[%s799 + $0x98] sm:$0xff]
        %v820 = vld [vmem:[%s799 + $0xa0] sm:$0xff]
        %v821 = vld [vmem:[%s799 + $0xa8] sm:$0xff]
        %v822 = vld [vmem:[%s799 + $0xb0] sm:$0xff]
        %v823 = vld [vmem:[%s799 + $0xb8] sm:$0xff]
        %v824 = vld [vmem:[%s799 + $0xc0] sm:$0xff]
        %v825 = vld [vmem:[%s799 + $0xc8] sm:$0xff]
        %v826 = vld [vmem:[%s799 + $0xd0] sm:$0xff]
        %v827 = vld [vmem:[%s799 + $0xd8] sm:$0xff]
        %v828 = vld [vmem:[%s799 + $0xe0] sm:$0xff]
        %v829 = vld [vmem:[%s799 + $0xe8] sm:$0xff]
        %v830 = vld [vmem:[%s799 + $0xf0] sm:$0xff]
        %v831 = vld [vmem:[%s799 + $0xf8] sm:$0xff]
        %v832 = vld [vmem:[%s799 + $0x100] sm:$0xff]
        %v833 = vld [vmem:[%s799 + $0x108] sm:$0xff]
        %v834 = vld [vmem:[%s799 + $0x110] sm:$0xff]
        %v835 = vld [vmem:[%s799 + $0x118] sm:$0xff]
        %v836 = vld [vmem:[%s799 + $0x120] sm:$0xff]
        %v837 = vld [vmem:[%s799 + $0x128] sm:$0xff]
        %v838 = vld [vmem:[%s799 + $0x130] sm:$0xff]
        %v839 = vld [vmem:[%s799 + $0x138] sm:$0xff]
        %v840 = vld [vmem:[%s799 + $0x140] sm:$0xff]
        %v841 = vld [vmem:[%s799 + $0x148] sm:$0xff]
        %v842 = vld [vmem:[%s799 + $0x150] sm:$0xff]
        %v843 = vld [vmem:[%s799 + $0x158] sm:$0xff]
        %v844 = vld [vmem:[%s799 + $0x160] sm:$0xff]
        %v845 = vld [vmem:[%s799 + $0x168] sm:$0xff]
        %v846 = vld [vmem:[%s799 + $0x170] sm:$0xff]
        %v847 = vld [vmem:[%s799 + $0x178] sm:$0xff]
        %v848 = vld [vmem:[%s799 + $0x180] sm:$0xff]
        %v849 = vld [vmem:[%s799 + $0x188] sm:$0xff]
        %v850 = vld [vmem:[%s799 + $0x190] sm:$0xff]
        %v851 = vld [vmem:[%s799 + $0x198] sm:$0xff]
        %v852 = vld [vmem:[%s799 + $0x1a0] sm:$0xff]
        %v853 = vld [vmem:[%s799 + $0x1a8] sm:$0xff]
        %v854 = vld [vmem:[%s799 + $0x1b0] sm:$0xff]
        %v855 = vld [vmem:[%s799 + $0x1b8] sm:$0xff]
        %v856 = vld [vmem:[%s799 + $0x1c0] sm:$0xff]
        %v857 = vld [vmem:[%s799 + $0x1c8] sm:$0xff]
        %v858 = vld [vmem:[%s799 + $0x1d0] sm:$0xff]
        %v859 = vld [vmem:[%s799 + $0x1d8] sm:$0xff]
        %vm864 = vcmask 1045504
        %v865 = vrot.slane %v795, 2
        %v866 = vrot.slane %v336, 2
        %v867 = vsel %vm864, %v865, %v866
        %v868 = vrot.slane %v796, 2
        %v869 = vrot.slane %v337, 2
        %v870 = vsel %vm864, %v868, %v869
        %v871 = vrot.slane %v797, 2
        %v872 = vsel %vm864, %v866, %v871
        %v873 = vrot.slane %v798, 2
        %v874 = vsel %vm864, %v869, %v873
        %v877 = vsel %vm298, %v870, 0
        %v879 = vsel %vm298, %v874, 0
        %881 = vmatprep.subr.mxu0 %v846
        %882 = vmatpush1.msra.mxu0 %v845
        %883 = vmatprep.subr.mxu0 %v843
        %884 = vmatpush1.msra.mxu0 %v842
        %885 = vmatprep.subr.mxu0 %v840
        %886 = vmatpush1.msra.mxu0 %v839
        %887 = vmatprep.subr.mxu0 %v837
        %888 = vmatpush1.msra.mxu0 %v836
        %889 = vmatprep.subr.mxu0 %v834
        %890 = vmatpush1.msra.mxu0 %v833
        %891 = vmatprep.subr.mxu0 %v831
        %892 = vmatpush1.msra.mxu0 %v830
        %893 = vmatprep.subr.mxu0 %v828
        %894 = vmatpush1.msra.mxu0 %v827
        %895 = vmatprep.subr.mxu0 %v825
        %896 = vmatpush1.msra.mxu0 %v824
        %897 = vmatprep.subr.mxu0 %v822
        %898 = vmatpush1.msra.mxu0 %v821
        %899 = vmatprep.subr.mxu0 %v819
        %900 = vmatpush1.msra.mxu0 %v818
        %901 = vmatprep.subr.mxu0 %v816
        %902 = vmatpush1.msra.mxu0 %v815
        %903 = vmatprep.subr.mxu0 %v813
        %904 = vmatpush1.msra.mxu0 %v812
        %905 = vmatprep.subr.mxu0 %v810
        %906 = vmatpush1.msra.mxu0 %v809
        %907 = vmatprep.subr.mxu0 %v807
        %908 = vmatpush1.msra.mxu0 %v806
        %909 = vmatprep.subr.mxu0 %v804
        %910 = vmatpush1.msra.mxu0 %v803
        %911 = vmatprep.subr.mxu0 %v801
        %912 = vmatpush1.msra.mxu0 %v800
        %913 = vmatprep.subr.mxu0 0.0
        %914 = vmatpush2.msra.mxu0 0.0
        %915 = vmatprep.subr.mxu0 0.0
        %916 = vmatpush2.msra.mxu0 0.0
        %917 = vmatprep.subr.mxu0 0.0
        %918 = vmatpush2.msra.mxu0 0.0
        %919 = vmatprep.subr.mxu0 0.0
        %920 = vmatpush2.msra.mxu0 0.0
        %921 = vmatprep.subr.mxu0 0.0
        %922 = vmatpush2.msra.mxu0 0.0
        %923 = vmatprep.subr.mxu0 0.0
        %924 = vmatpush2.msra.mxu0 0.0
        %925 = vmatprep.subr.mxu0 0.0
        %926 = vmatpush2.msra.mxu0 0.0
        %927 = vmatprep.subr.mxu0 0.0
        %928 = vmatpush2.msra.mxu0 0.0
        %929 = vmatprep.subr.mxu0 0.0
        %930 = vmatpush2.msra.mxu0 0.0
        %931 = vmatprep.subr.mxu0 0.0
        %932 = vmatpush2.msra.mxu0 0.0
        %933 = vmatprep.subr.mxu0 0.0
        %934 = vmatpush2.msra.mxu0 0.0
        %935 = vmatprep.subr.mxu0 0.0
        %936 = vmatpush2.msra.mxu0 0.0
        %937 = vmatprep.subr.mxu0 %v858
        %938 = vmatpush2.msra.mxu0 %v857
        %939 = vmatprep.subr.mxu0 %v855
        %940 = vmatpush2.msra.mxu0 %v854
        %941 = vmatprep.subr.mxu0 %v852
        %942 = vmatpush2.msra.mxu0 %v851
        %943 = vmatprep.subr.mxu0 %v849
        %944 = vmatpush2.msra.mxu0 %v848
        %945 = vmatprep.mubr.f32.mxu0 %v877
        %946 = vmatmul.mubr.f32.gmra.mxu0 %v867
        %v947 = vpop.f32.mrf.mxu0
        %v948 = vadd.f32 0.0, %v947
        %v949 = vpop.f32.mrf.mxu0
        %v950 = vadd.f32 0.0, %v949
        %951 = vmatprep.mubr.f32.mxu0 %v879
        %952 = vmatmul.mubr.f32.gmra.mxu0 %v872
        %v953 = vpop.f32.mrf.mxu0
        %v954 = vadd.f32 0.0, %v953
        %v955 = vpop.f32.mrf.mxu0
        %v956 = vadd.f32 0.0, %v955
        %957 = vdwg.mxu0
        %958 = vmatprep.subr.mxu0 0.0
        %959 = vmatpush1.msra.mxu0 %v847
        %960 = vmatprep.subr.mxu0 0.0
        %961 = vmatpush1.msra.mxu0 %v844
        %962 = vmatprep.subr.mxu0 0.0
        %963 = vmatpush1.msra.mxu0 %v841
        %964 = vmatprep.subr.mxu0 0.0
        %965 = vmatpush1.msra.mxu0 %v838
        %966 = vmatprep.subr.mxu0 0.0
        %967 = vmatpush1.msra.mxu0 %v835
        %968 = vmatprep.subr.mxu0 0.0
        %969 = vmatpush1.msra.mxu0 %v832
        %970 = vmatprep.subr.mxu0 0.0
        %971 = vmatpush1.msra.mxu0 %v829
        %972 = vmatprep.subr.mxu0 0.0
        %973 = vmatpush1.msra.mxu0 %v826
        %974 = vmatprep.subr.mxu0 0.0
        %975 = vmatpush1.msra.mxu0 %v823
        %976 = vmatprep.subr.mxu0 0.0
        %977 = vmatpush1.msra.mxu0 %v820
        %978 = vmatprep.subr.mxu0 0.0
        %979 = vmatpush1.msra.mxu0 %v817
        %980 = vmatprep.subr.mxu0 0.0
        %981 = vmatpush1.msra.mxu0 %v814
        %982 = vmatprep.subr.mxu0 0.0
        %983 = vmatpush1.msra.mxu0 %v811
        %984 = vmatprep.subr.mxu0 0.0
        %985 = vmatpush1.msra.mxu0 %v808
        %986 = vmatprep.subr.mxu0 0.0
        %987 = vmatpush1.msra.mxu0 %v805
        %988 = vmatprep.subr.mxu0 0.0
        %989 = vmatpush1.msra.mxu0 %v802
        %990 = vmatprep.subr.mxu0 0.0
        %991 = vmatpush2.msra.mxu0 0.0
        %992 = vmatprep.subr.mxu0 0.0
        %993 = vmatpush2.msra.mxu0 0.0
        %994 = vmatprep.subr.mxu0 0.0
        %995 = vmatpush2.msra.mxu0 0.0
        %996 = vmatprep.subr.mxu0 0.0
        %997 = vmatpush2.msra.mxu0 0.0
        %998 = vmatprep.subr.mxu0 0.0
        %999 = vmatpush2.msra.mxu0 0.0
        %1000 = vmatprep.subr.mxu0 0.0
        %1001 = vmatpush2.msra.mxu0 0.0
        %1002 = vmatprep.subr.mxu0 0.0
        %1003 = vmatpush2.msra.mxu0 0.0
        %1004 = vmatprep.subr.mxu0 0.0
        %1005 = vmatpush2.msra.mxu0 0.0
        %1006 = vmatprep.subr.mxu0 0.0
        %1007 = vmatpush2.msra.mxu0 0.0
        %1008 = vmatprep.subr.mxu0 0.0
        %1009 = vmatpush2.msra.mxu0 0.0
        %1010 = vmatprep.subr.mxu0 0.0
        %1011 = vmatpush2.msra.mxu0 0.0
        %1012 = vmatprep.subr.mxu0 0.0
        %1013 = vmatpush2.msra.mxu0 0.0
        %1014 = vmatprep.subr.mxu0 0.0
        %1015 = vmatpush2.msra.mxu0 %v859
        %1016 = vmatprep.subr.mxu0 0.0
        %1017 = vmatpush2.msra.mxu0 %v856
        %1018 = vmatprep.subr.mxu0 0.0
        %1019 = vmatpush2.msra.mxu0 %v853
        %1020 = vmatprep.subr.mxu0 0.0
        %1021 = vmatpush2.msra.mxu0 %v850
        %1022 = vmatprep.mubr.f32.mxu0 %v877
        %1023 = vmatmul.mubr.f32.gmra.mxu0 %v867
        %v1024 = vpop.f32.mrf.mxu0
        %v1025 = vadd.f32 0.0, %v1024
        %v1026 = vpop.f32.mrf.mxu0
        %1027 = vmatprep.mubr.f32.mxu0 %v879
        %1028 = vmatmul.mubr.f32.gmra.mxu0 %v872
        %v1029 = vpop.f32.mrf.mxu0
        %v1030 = vadd.f32 0.0, %v1029
        %v1031 = vpop.f32.mrf.mxu0
        %1032 = vdwg.mxu0
        %v1033 = vadd.f32 %v710, %v948
        %v1034 = vadd.f32 %v712, %v950
        %v1035 = vadd.f32 %v787, %v1025
        %v1036 = vadd.f32 %v716, %v954
        %v1037 = vadd.f32 %v718, %v956
        %v1038 = vadd.f32 %v792, %v1030
        %v1039 = vld [vmem:[#allocation2] sm:$0xf8]
        %v1040 = vld [vmem:[#allocation2 + $0x8] sm:$0xf8]
        %v1041 = vld [vmem:[#allocation2 + $0x20] sm:$0x7]
        %v1042 = vld [vmem:[#allocation2 + $0x28] sm:$0x7]
        %s1043 = scalar_lea.vmem [#allocation7], 1440
        %v1044 = vld [vmem:[%s1043] sm:$0xff]
        %v1045 = vld [vmem:[%s1043 + $0x8] sm:$0xff]
        %v1046 = vld [vmem:[%s1043 + $0x10] sm:$0xff]
        %v1047 = vld [vmem:[%s1043 + $0x18] sm:$0xff]
        %v1048 = vld [vmem:[%s1043 + $0x20] sm:$0xff]
        %v1049 = vld [vmem:[%s1043 + $0x28] sm:$0xff]
        %v1050 = vld [vmem:[%s1043 + $0x30] sm:$0xff]
        %v1051 = vld [vmem:[%s1043 + $0x38] sm:$0xff]
        %v1052 = vld [vmem:[%s1043 + $0x40] sm:$0xff]
        %v1053 = vld [vmem:[%s1043 + $0x48] sm:$0xff]
        %v1054 = vld [vmem:[%s1043 + $0x50] sm:$0xff]
        %v1055 = vld [vmem:[%s1043 + $0x58] sm:$0xff]
        %v1056 = vld [vmem:[%s1043 + $0x60] sm:$0xff]
        %v1057 = vld [vmem:[%s1043 + $0x68] sm:$0xff]
        %v1058 = vld [vmem:[%s1043 + $0x70] sm:$0xff]
        %v1059 = vld [vmem:[%s1043 + $0x78] sm:$0xff]
        %v1060 = vld [vmem:[%s1043 + $0x80] sm:$0xff]
        %v1061 = vld [vmem:[%s1043 + $0x88] sm:$0xff]
        %v1062 = vld [vmem:[%s1043 + $0x90] sm:$0xff]
        %v1063 = vld [vmem:[%s1043 + $0x98] sm:$0xff]
        %v1064 = vld [vmem:[%s1043 + $0xa0] sm:$0xff]
        %v1065 = vld [vmem:[%s1043 + $0xa8] sm:$0xff]
        %v1066 = vld [vmem:[%s1043 + $0xb0] sm:$0xff]
        %v1067 = vld [vmem:[%s1043 + $0xb8] sm:$0xff]
        %v1068 = vld [vmem:[%s1043 + $0xc0] sm:$0xff]
        %v1069 = vld [vmem:[%s1043 + $0xc8] sm:$0xff]
        %v1070 = vld [vmem:[%s1043 + $0xd0] sm:$0xff]
        %v1071 = vld [vmem:[%s1043 + $0xd8] sm:$0xff]
        %v1072 = vld [vmem:[%s1043 + $0xe0] sm:$0xff]
        %v1073 = vld [vmem:[%s1043 + $0xe8] sm:$0xff]
        %v1074 = vld [vmem:[%s1043 + $0xf0] sm:$0xff]
        %v1075 = vld [vmem:[%s1043 + $0xf8] sm:$0xff]
        %v1076 = vld [vmem:[%s1043 + $0x100] sm:$0xff]
        %v1077 = vld [vmem:[%s1043 + $0x108] sm:$0xff]
        %v1078 = vld [vmem:[%s1043 + $0x110] sm:$0xff]
        %v1079 = vld [vmem:[%s1043 + $0x118] sm:$0xff]
        %v1080 = vld [vmem:[%s1043 + $0x120] sm:$0xff]
        %v1081 = vld [vmem:[%s1043 + $0x128] sm:$0xff]
        %v1082 = vld [vmem:[%s1043 + $0x130] sm:$0xff]
        %v1083 = vld [vmem:[%s1043 + $0x138] sm:$0xff]
        %v1084 = vld [vmem:[%s1043 + $0x140] sm:$0xff]
        %v1085 = vld [vmem:[%s1043 + $0x148] sm:$0xff]
        %v1086 = vld [vmem:[%s1043 + $0x150] sm:$0xff]
        %v1087 = vld [vmem:[%s1043 + $0x158] sm:$0xff]
        %v1088 = vld [vmem:[%s1043 + $0x160] sm:$0xff]
        %v1089 = vld [vmem:[%s1043 + $0x168] sm:$0xff]
        %v1090 = vld [vmem:[%s1043 + $0x170] sm:$0xff]
        %v1091 = vld [vmem:[%s1043 + $0x178] sm:$0xff]
        %v1092 = vld [vmem:[%s1043 + $0x180] sm:$0xff]
        %v1093 = vld [vmem:[%s1043 + $0x188] sm:$0xff]
        %v1094 = vld [vmem:[%s1043 + $0x190] sm:$0xff]
        %v1095 = vld [vmem:[%s1043 + $0x198] sm:$0xff]
        %v1096 = vld [vmem:[%s1043 + $0x1a0] sm:$0xff]
        %v1097 = vld [vmem:[%s1043 + $0x1a8] sm:$0xff]
        %v1098 = vld [vmem:[%s1043 + $0x1b0] sm:$0xff]
        %v1099 = vld [vmem:[%s1043 + $0x1b8] sm:$0xff]
        %v1100 = vld [vmem:[%s1043 + $0x1c0] sm:$0xff]
        %v1101 = vld [vmem:[%s1043 + $0x1c8] sm:$0xff]
        %v1102 = vld [vmem:[%s1043 + $0x1d0] sm:$0xff]
        %v1103 = vld [vmem:[%s1043 + $0x1d8] sm:$0xff]
        %vm1108 = vcmask 1044480
        %v1109 = vrot.slane %v1039, 3
        %v1110 = vrot.slane %v336, 3
        %v1111 = vsel %vm1108, %v1109, %v1110
        %v1112 = vrot.slane %v1040, 3
        %v1113 = vrot.slane %v337, 3
        %v1114 = vsel %vm1108, %v1112, %v1113
        %v1115 = vrot.slane %v1041, 3
        %v1116 = vsel %vm1108, %v1110, %v1115
        %v1117 = vrot.slane %v1042, 3
        %v1118 = vsel %vm1108, %v1113, %v1117
        %v1121 = vsel %vm298, %v1114, 0
        %v1123 = vsel %vm298, %v1118, 0
        %1125 = vmatprep.subr.mxu0 %v1090
        %1126 = vmatpush1.msra.mxu0 %v1089
        %1127 = vmatprep.subr.mxu0 %v1087
        %1128 = vmatpush1.msra.mxu0 %v1086
        %1129 = vmatprep.subr.mxu0 %v1084
        %1130 = vmatpush1.msra.mxu0 %v1083
        %1131 = vmatprep.subr.mxu0 %v1081
        %1132 = vmatpush1.msra.mxu0 %v1080
        %1133 = vmatprep.subr.mxu0 %v1078
        %1134 = vmatpush1.msra.mxu0 %v1077
        %1135 = vmatprep.subr.mxu0 %v1075
        %1136 = vmatpush1.msra.mxu0 %v1074
        %1137 = vmatprep.subr.mxu0 %v1072
        %1138 = vmatpush1.msra.mxu0 %v1071
        %1139 = vmatprep.subr.mxu0 %v1069
        %1140 = vmatpush1.msra.mxu0 %v1068
        %1141 = vmatprep.subr.mxu0 %v1066
        %1142 = vmatpush1.msra.mxu0 %v1065
        %1143 = vmatprep.subr.mxu0 %v1063
        %1144 = vmatpush1.msra.mxu0 %v1062
        %1145 = vmatprep.subr.mxu0 %v1060
        %1146 = vmatpush1.msra.mxu0 %v1059
        %1147 = vmatprep.subr.mxu0 %v1057
        %1148 = vmatpush1.msra.mxu0 %v1056
        %1149 = vmatprep.subr.mxu0 %v1054
        %1150 = vmatpush1.msra.mxu0 %v1053
        %1151 = vmatprep.subr.mxu0 %v1051
        %1152 = vmatpush1.msra.mxu0 %v1050
        %1153 = vmatprep.subr.mxu0 %v1048
        %1154 = vmatpush1.msra.mxu0 %v1047
        %1155 = vmatprep.subr.mxu0 %v1045
        %1156 = vmatpush1.msra.mxu0 %v1044
        %1157 = vmatprep.subr.mxu0 0.0
        %1158 = vmatpush2.msra.mxu0 0.0
        %1159 = vmatprep.subr.mxu0 0.0
        %1160 = vmatpush2.msra.mxu0 0.0
        %1161 = vmatprep.subr.mxu0 0.0
        %1162 = vmatpush2.msra.mxu0 0.0
        %1163 = vmatprep.subr.mxu0 0.0
        %1164 = vmatpush2.msra.mxu0 0.0
        %1165 = vmatprep.subr.mxu0 0.0
        %1166 = vmatpush2.msra.mxu0 0.0
        %1167 = vmatprep.subr.mxu0 0.0
        %1168 = vmatpush2.msra.mxu0 0.0
        %1169 = vmatprep.subr.mxu0 0.0
        %1170 = vmatpush2.msra.mxu0 0.0
        %1171 = vmatprep.subr.mxu0 0.0
        %1172 = vmatpush2.msra.mxu0 0.0
        %1173 = vmatprep.subr.mxu0 0.0
        %1174 = vmatpush2.msra.mxu0 0.0
        %1175 = vmatprep.subr.mxu0 0.0
        %1176 = vmatpush2.msra.mxu0 0.0
        %1177 = vmatprep.subr.mxu0 0.0
        %1178 = vmatpush2.msra.mxu0 0.0
        %1179 = vmatprep.subr.mxu0 0.0
        %1180 = vmatpush2.msra.mxu0 0.0
        %1181 = vmatprep.subr.mxu0 %v1102
        %1182 = vmatpush2.msra.mxu0 %v1101
        %1183 = vmatprep.subr.mxu0 %v1099
        %1184 = vmatpush2.msra.mxu0 %v1098
        %1185 = vmatprep.subr.mxu0 %v1096
        %1186 = vmatpush2.msra.mxu0 %v1095
        %1187 = vmatprep.subr.mxu0 %v1093
        %1188 = vmatpush2.msra.mxu0 %v1092
        %1189 = vmatprep.mubr.f32.mxu0 %v1121
        %1190 = vmatmul.mubr.f32.gmra.mxu0 %v1111
        %v1191 = vpop.f32.mrf.mxu0
        %v1192 = vadd.f32 0.0, %v1191
        %v1193 = vpop.f32.mrf.mxu0
        %v1194 = vadd.f32 0.0, %v1193
        %1195 = vmatprep.mubr.f32.mxu0 %v1123
        %1196 = vmatmul.mubr.f32.gmra.mxu0 %v1116
        %v1197 = vpop.f32.mrf.mxu0
        %v1198 = vadd.f32 0.0, %v1197
        %v1199 = vpop.f32.mrf.mxu0
        %v1200 = vadd.f32 0.0, %v1199
        %1201 = vdwg.mxu0
        %1202 = vmatprep.subr.mxu0 0.0
        %1203 = vmatpush1.msra.mxu0 %v1091
        %1204 = vmatprep.subr.mxu0 0.0
        %1205 = vmatpush1.msra.mxu0 %v1088
        %1206 = vmatprep.subr.mxu0 0.0
        %1207 = vmatpush1.msra.mxu0 %v1085
        %1208 = vmatprep.subr.mxu0 0.0
        %1209 = vmatpush1.msra.mxu0 %v1082
        %1210 = vmatprep.subr.mxu0 0.0
        %1211 = vmatpush1.msra.mxu0 %v1079
        %1212 = vmatprep.subr.mxu0 0.0
        %1213 = vmatpush1.msra.mxu0 %v1076
        %1214 = vmatprep.subr.mxu0 0.0
        %1215 = vmatpush1.msra.mxu0 %v1073
        %1216 = vmatprep.subr.mxu0 0.0
        %1217 = vmatpush1.msra.mxu0 %v1070
        %1218 = vmatprep.subr.mxu0 0.0
        %1219 = vmatpush1.msra.mxu0 %v1067
        %1220 = vmatprep.subr.mxu0 0.0
        %1221 = vmatpush1.msra.mxu0 %v1064
        %1222 = vmatprep.subr.mxu0 0.0
        %1223 = vmatpush1.msra.mxu0 %v1061
        %1224 = vmatprep.subr.mxu0 0.0
        %1225 = vmatpush1.msra.mxu0 %v1058
        %1226 = vmatprep.subr.mxu0 0.0
        %1227 = vmatpush1.msra.mxu0 %v1055
        %1228 = vmatprep.subr.mxu0 0.0
        %1229 = vmatpush1.msra.mxu0 %v1052
        %1230 = vmatprep.subr.mxu0 0.0
        %1231 = vmatpush1.msra.mxu0 %v1049
        %1232 = vmatprep.subr.mxu0 0.0
        %1233 = vmatpush1.msra.mxu0 %v1046
        %1234 = vmatprep.subr.mxu0 0.0
        %1235 = vmatpush2.msra.mxu0 0.0
        %1236 = vmatprep.subr.mxu0 0.0
        %1237 = vmatpush2.msra.mxu0 0.0
        %1238 = vmatprep.subr.mxu0 0.0
        %1239 = vmatpush2.msra.mxu0 0.0
        %1240 = vmatprep.subr.mxu0 0.0
        %1241 = vmatpush2.msra.mxu0 0.0
        %1242 = vmatprep.subr.mxu0 0.0
        %1243 = vmatpush2.msra.mxu0 0.0
        %1244 = vmatprep.subr.mxu0 0.0
        %1245 = vmatpush2.msra.mxu0 0.0
        %1246 = vmatprep.subr.mxu0 0.0
        %1247 = vmatpush2.msra.mxu0 0.0
        %1248 = vmatprep.subr.mxu0 0.0
        %1249 = vmatpush2.msra.mxu0 0.0
        %1250 = vmatprep.subr.mxu0 0.0
        %1251 = vmatpush2.msra.mxu0 0.0
        %1252 = vmatprep.subr.mxu0 0.0
        %1253 = vmatpush2.msra.mxu0 0.0
        %1254 = vmatprep.subr.mxu0 0.0
        %1255 = vmatpush2.msra.mxu0 0.0
        %1256 = vmatprep.subr.mxu0 0.0
        %1257 = vmatpush2.msra.mxu0 0.0
        %1258 = vmatprep.subr.mxu0 0.0
        %1259 = vmatpush2.msra.mxu0 %v1103
        %1260 = vmatprep.subr.mxu0 0.0
        %1261 = vmatpush2.msra.mxu0 %v1100
        %1262 = vmatprep.subr.mxu0 0.0
        %1263 = vmatpush2.msra.mxu0 %v1097
        %1264 = vmatprep.subr.mxu0 0.0
        %1265 = vmatpush2.msra.mxu0 %v1094
        %1266 = vmatprep.mubr.f32.mxu0 %v1121
        %1267 = vmatmul.mubr.f32.gmra.mxu0 %v1111
        %v1268 = vpop.f32.mrf.mxu0
        %v1269 = vadd.f32 0.0, %v1268
        %v1270 = vpop.f32.mrf.mxu0
        %1271 = vmatprep.mubr.f32.mxu0 %v1123
        %1272 = vmatmul.mubr.f32.gmra.mxu0 %v1116
        %v1273 = vpop.f32.mrf.mxu0
        %v1274 = vadd.f32 0.0, %v1273
        %v1275 = vpop.f32.mrf.mxu0
        %1276 = vdwg.mxu0
        %v1277 = vadd.f32 %v1033, %v1192
        %v1278 = vadd.f32 %v1034, %v1194
        %v1279 = vadd.f32 %v1035, %v1269
        %v1280 = vadd.f32 %v1036, %v1198
        %v1281 = vadd.f32 %v1037, %v1200
        %v1282 = vadd.f32 %v1038, %v1274
        %v1283 = vld [vmem:[#allocation2] sm:$0xf0]
        %v1284 = vld [vmem:[#allocation2 + $0x8] sm:$0xf0]
        %v1285 = vld [vmem:[#allocation2 + $0x20] sm:$0xf]
        %v1286 = vld [vmem:[#allocation2 + $0x28] sm:$0xf]
        %s1287 = scalar_lea.vmem [#allocation7], 1920
        %v1288 = vld [vmem:[%s1287] sm:$0xff]
        %v1289 = vld [vmem:[%s1287 + $0x8] sm:$0xff]
        %v1290 = vld [vmem:[%s1287 + $0x10] sm:$0xff]
        %v1291 = vld [vmem:[%s1287 + $0x18] sm:$0xff]
        %v1292 = vld [vmem:[%s1287 + $0x20] sm:$0xff]
        %v1293 = vld [vmem:[%s1287 + $0x28] sm:$0xff]
        %v1294 = vld [vmem:[%s1287 + $0x30] sm:$0xff]
        %v1295 = vld [vmem:[%s1287 + $0x38] sm:$0xff]
        %v1296 = vld [vmem:[%s1287 + $0x40] sm:$0xff]
        %v1297 = vld [vmem:[%s1287 + $0x48] sm:$0xff]
        %v1298 = vld [vmem:[%s1287 + $0x50] sm:$0xff]
        %v1299 = vld [vmem:[%s1287 + $0x58] sm:$0xff]
        %v1300 = vld [vmem:[%s1287 + $0x60] sm:$0xff]
        %v1301 = vld [vmem:[%s1287 + $0x68] sm:$0xff]
        %v1302 = vld [vmem:[%s1287 + $0x70] sm:$0xff]
        %v1303 = vld [vmem:[%s1287 + $0x78] sm:$0xff]
        %v1304 = vld [vmem:[%s1287 + $0x80] sm:$0xff]
        %v1305 = vld [vmem:[%s1287 + $0x88] sm:$0xff]
        %v1306 = vld [vmem:[%s1287 + $0x90] sm:$0xff]
        %v1307 = vld [vmem:[%s1287 + $0x98] sm:$0xff]
        %v1308 = vld [vmem:[%s1287 + $0xa0] sm:$0xff]
        %v1309 = vld [vmem:[%s1287 + $0xa8] sm:$0xff]
        %v1310 = vld [vmem:[%s1287 + $0xb0] sm:$0xff]
        %v1311 = vld [vmem:[%s1287 + $0xb8] sm:$0xff]
        %v1312 = vld [vmem:[%s1287 + $0xc0] sm:$0xff]
        %v1313 = vld [vmem:[%s1287 + $0xc8] sm:$0xff]
        %v1314 = vld [vmem:[%s1287 + $0xd0] sm:$0xff]
        %v1315 = vld [vmem:[%s1287 + $0xd8] sm:$0xff]
        %v1316 = vld [vmem:[%s1287 + $0xe0] sm:$0xff]
        %v1317 = vld [vmem:[%s1287 + $0xe8] sm:$0xff]
        %v1318 = vld [vmem:[%s1287 + $0xf0] sm:$0xff]
        %v1319 = vld [vmem:[%s1287 + $0xf8] sm:$0xff]
        %v1320 = vld [vmem:[%s1287 + $0x100] sm:$0xff]
        %v1321 = vld [vmem:[%s1287 + $0x108] sm:$0xff]
        %v1322 = vld [vmem:[%s1287 + $0x110] sm:$0xff]
        %v1323 = vld [vmem:[%s1287 + $0x118] sm:$0xff]
        %v1324 = vld [vmem:[%s1287 + $0x120] sm:$0xff]
        %v1325 = vld [vmem:[%s1287 + $0x128] sm:$0xff]
        %v1326 = vld [vmem:[%s1287 + $0x130] sm:$0xff]
        %v1327 = vld [vmem:[%s1287 + $0x138] sm:$0xff]
        %v1328 = vld [vmem:[%s1287 + $0x140] sm:$0xff]
        %v1329 = vld [vmem:[%s1287 + $0x148] sm:$0xff]
        %v1330 = vld [vmem:[%s1287 + $0x150] sm:$0xff]
        %v1331 = vld [vmem:[%s1287 + $0x158] sm:$0xff]
        %v1332 = vld [vmem:[%s1287 + $0x160] sm:$0xff]
        %v1333 = vld [vmem:[%s1287 + $0x168] sm:$0xff]
        %v1334 = vld [vmem:[%s1287 + $0x170] sm:$0xff]
        %v1335 = vld [vmem:[%s1287 + $0x178] sm:$0xff]
        %v1336 = vld [vmem:[%s1287 + $0x180] sm:$0xff]
        %v1337 = vld [vmem:[%s1287 + $0x188] sm:$0xff]
        %v1338 = vld [vmem:[%s1287 + $0x190] sm:$0xff]
        %v1339 = vld [vmem:[%s1287 + $0x198] sm:$0xff]
        %v1340 = vld [vmem:[%s1287 + $0x1a0] sm:$0xff]
        %v1341 = vld [vmem:[%s1287 + $0x1a8] sm:$0xff]
        %v1342 = vld [vmem:[%s1287 + $0x1b0] sm:$0xff]
        %v1343 = vld [vmem:[%s1287 + $0x1b8] sm:$0xff]
        %v1344 = vld [vmem:[%s1287 + $0x1c0] sm:$0xff]
        %v1345 = vld [vmem:[%s1287 + $0x1c8] sm:$0xff]
        %v1346 = vld [vmem:[%s1287 + $0x1d0] sm:$0xff]
        %v1347 = vld [vmem:[%s1287 + $0x1d8] sm:$0xff]
        %vm1352 = vcmask 1043456
        %v1353 = vrot.slane %v1283, 4
        %v1354 = vrot.slane %v336, 4
        %v1355 = vsel %vm1352, %v1353, %v1354
        %v1356 = vrot.slane %v1284, 4
        %v1357 = vrot.slane %v337, 4
        %v1358 = vsel %vm1352, %v1356, %v1357
        %v1359 = vrot.slane %v1285, 4
        %v1360 = vsel %vm1352, %v1354, %v1359
        %v1361 = vrot.slane %v1286, 4
        %v1362 = vsel %vm1352, %v1357, %v1361
        %v1365 = vsel %vm298, %v1358, 0
        %v1367 = vsel %vm298, %v1362, 0
        %1369 = vmatprep.subr.mxu0 %v1334
        %1370 = vmatpush1.msra.mxu0 %v1333
        %1371 = vmatprep.subr.mxu0 %v1331
        %1372 = vmatpush1.msra.mxu0 %v1330
        %1373 = vmatprep.subr.mxu0 %v1328
        %1374 = vmatpush1.msra.mxu0 %v1327
        %1375 = vmatprep.subr.mxu0 %v1325
        %1376 = vmatpush1.msra.mxu0 %v1324
        %1377 = vmatprep.subr.mxu0 %v1322
        %1378 = vmatpush1.msra.mxu0 %v1321
        %1379 = vmatprep.subr.mxu0 %v1319
        %1380 = vmatpush1.msra.mxu0 %v1318
        %1381 = vmatprep.subr.mxu0 %v1316
        %1382 = vmatpush1.msra.mxu0 %v1315
        %1383 = vmatprep.subr.mxu0 %v1313
        %1384 = vmatpush1.msra.mxu0 %v1312
        %1385 = vmatprep.subr.mxu0 %v1310
        %1386 = vmatpush1.msra.mxu0 %v1309
        %1387 = vmatprep.subr.mxu0 %v1307
        %1388 = vmatpush1.msra.mxu0 %v1306
        %1389 = vmatprep.subr.mxu0 %v1304
        %1390 = vmatpush1.msra.mxu0 %v1303
        %1391 = vmatprep.subr.mxu0 %v1301
        %1392 = vmatpush1.msra.mxu0 %v1300
        %1393 = vmatprep.subr.mxu0 %v1298
        %1394 = vmatpush1.msra.mxu0 %v1297
        %1395 = vmatprep.subr.mxu0 %v1295
        %1396 = vmatpush1.msra.mxu0 %v1294
        %1397 = vmatprep.subr.mxu0 %v1292
        %1398 = vmatpush1.msra.mxu0 %v1291
        %1399 = vmatprep.subr.mxu0 %v1289
        %1400 = vmatpush1.msra.mxu0 %v1288
        %1401 = vmatprep.subr.mxu0 0.0
        %1402 = vmatpush2.msra.mxu0 0.0
        %1403 = vmatprep.subr.mxu0 0.0
        %1404 = vmatpush2.msra.mxu0 0.0
        %1405 = vmatprep.subr.mxu0 0.0
        %1406 = vmatpush2.msra.mxu0 0.0
        %1407 = vmatprep.subr.mxu0 0.0
        %1408 = vmatpush2.msra.mxu0 0.0
        %1409 = vmatprep.subr.mxu0 0.0
        %1410 = vmatpush2.msra.mxu0 0.0
        %1411 = vmatprep.subr.mxu0 0.0
        %1412 = vmatpush2.msra.mxu0 0.0
        %1413 = vmatprep.subr.mxu0 0.0
        %1414 = vmatpush2.msra.mxu0 0.0
        %1415 = vmatprep.subr.mxu0 0.0
        %1416 = vmatpush2.msra.mxu0 0.0
        %1417 = vmatprep.subr.mxu0 0.0
        %1418 = vmatpush2.msra.mxu0 0.0
        %1419 = vmatprep.subr.mxu0 0.0
        %1420 = vmatpush2.msra.mxu0 0.0
        %1421 = vmatprep.subr.mxu0 0.0
        %1422 = vmatpush2.msra.mxu0 0.0
        %1423 = vmatprep.subr.mxu0 0.0
        %1424 = vmatpush2.msra.mxu0 0.0
        %1425 = vmatprep.subr.mxu0 %v1346
        %1426 = vmatpush2.msra.mxu0 %v1345
        %1427 = vmatprep.subr.mxu0 %v1343
        %1428 = vmatpush2.msra.mxu0 %v1342
        %1429 = vmatprep.subr.mxu0 %v1340
        %1430 = vmatpush2.msra.mxu0 %v1339
        %1431 = vmatprep.subr.mxu0 %v1337
        %1432 = vmatpush2.msra.mxu0 %v1336
        %1433 = vmatprep.mubr.f32.mxu0 %v1365
        %1434 = vmatmul.mubr.f32.gmra.mxu0 %v1355
        %v1435 = vpop.f32.mrf.mxu0
        %v1436 = vadd.f32 0.0, %v1435
        %v1437 = vpop.f32.mrf.mxu0
        %v1438 = vadd.f32 0.0, %v1437
        %1439 = vmatprep.mubr.f32.mxu0 %v1367
        %1440 = vmatmul.mubr.f32.gmra.mxu0 %v1360
        %v1441 = vpop.f32.mrf.mxu0
        %v1442 = vadd.f32 0.0, %v1441
        %v1443 = vpop.f32.mrf.mxu0
        %v1444 = vadd.f32 0.0, %v1443
        %1445 = vdwg.mxu0
        %1446 = vmatprep.subr.mxu0 0.0
        %1447 = vmatpush1.msra.mxu0 %v1335
        %1448 = vmatprep.subr.mxu0 0.0
        %1449 = vmatpush1.msra.mxu0 %v1332
        %1450 = vmatprep.subr.mxu0 0.0
        %1451 = vmatpush1.msra.mxu0 %v1329
        %1452 = vmatprep.subr.mxu0 0.0
        %1453 = vmatpush1.msra.mxu0 %v1326
        %1454 = vmatprep.subr.mxu0 0.0
        %1455 = vmatpush1.msra.mxu0 %v1323
        %1456 = vmatprep.subr.mxu0 0.0
        %1457 = vmatpush1.msra.mxu0 %v1320
        %1458 = vmatprep.subr.mxu0 0.0
        %1459 = vmatpush1.msra.mxu0 %v1317
        %1460 = vmatprep.subr.mxu0 0.0
        %1461 = vmatpush1.msra.mxu0 %v1314
        %1462 = vmatprep.subr.mxu0 0.0
        %1463 = vmatpush1.msra.mxu0 %v1311
        %1464 = vmatprep.subr.mxu0 0.0
        %1465 = vmatpush1.msra.mxu0 %v1308
        %1466 = vmatprep.subr.mxu0 0.0
        %1467 = vmatpush1.msra.mxu0 %v1305
        %1468 = vmatprep.subr.mxu0 0.0
        %1469 = vmatpush1.msra.mxu0 %v1302
        %1470 = vmatprep.subr.mxu0 0.0
        %1471 = vmatpush1.msra.mxu0 %v1299
        %1472 = vmatprep.subr.mxu0 0.0
        %1473 = vmatpush1.msra.mxu0 %v1296
        %1474 = vmatprep.subr.mxu0 0.0
        %1475 = vmatpush1.msra.mxu0 %v1293
        %1476 = vmatprep.subr.mxu0 0.0
        %1477 = vmatpush1.msra.mxu0 %v1290
        %1478 = vmatprep.subr.mxu0 0.0
        %1479 = vmatpush2.msra.mxu0 0.0
        %1480 = vmatprep.subr.mxu0 0.0
        %1481 = vmatpush2.msra.mxu0 0.0
        %1482 = vmatprep.subr.mxu0 0.0
        %1483 = vmatpush2.msra.mxu0 0.0
        %1484 = vmatprep.subr.mxu0 0.0
        %1485 = vmatpush2.msra.mxu0 0.0
        %1486 = vmatprep.subr.mxu0 0.0
        %1487 = vmatpush2.msra.mxu0 0.0
        %1488 = vmatprep.subr.mxu0 0.0
        %1489 = vmatpush2.msra.mxu0 0.0
        %1490 = vmatprep.subr.mxu0 0.0
        %1491 = vmatpush2.msra.mxu0 0.0
        %1492 = vmatprep.subr.mxu0 0.0
        %1493 = vmatpush2.msra.mxu0 0.0
        %1494 = vmatprep.subr.mxu0 0.0
        %1495 = vmatpush2.msra.mxu0 0.0
        %1496 = vmatprep.subr.mxu0 0.0
        %1497 = vmatpush2.msra.mxu0 0.0
        %1498 = vmatprep.subr.mxu0 0.0
        %1499 = vmatpush2.msra.mxu0 0.0
        %1500 = vmatprep.subr.mxu0 0.0
        %1501 = vmatpush2.msra.mxu0 0.0
        %1502 = vmatprep.subr.mxu0 0.0
        %1503 = vmatpush2.msra.mxu0 %v1347
        %1504 = vmatprep.subr.mxu0 0.0
        %1505 = vmatpush2.msra.mxu0 %v1344
        %1506 = vmatprep.subr.mxu0 0.0
        %1507 = vmatpush2.msra.mxu0 %v1341
        %1508 = vmatprep.subr.mxu0 0.0
        %1509 = vmatpush2.msra.mxu0 %v1338
        %1510 = vmatprep.mubr.f32.mxu0 %v1365
        %1511 = vmatmul.mubr.f32.gmra.mxu0 %v1355
        %v1512 = vpop.f32.mrf.mxu0
        %v1513 = vadd.f32 0.0, %v1512
        %v1514 = vpop.f32.mrf.mxu0
        %1515 = vmatprep.mubr.f32.mxu0 %v1367
        %1516 = vmatmul.mubr.f32.gmra.mxu0 %v1360
        %v1517 = vpop.f32.mrf.mxu0
        %v1518 = vadd.f32 0.0, %v1517
        %v1519 = vpop.f32.mrf.mxu0
        %1520 = vdwg.mxu0
        %v1521 = vadd.f32 %v1277, %v1436
        %v1522 = vadd.f32 %v1278, %v1438
        %v1523 = vadd.f32 %v1279, %v1513
        %v1524 = vadd.f32 %v1280, %v1442
        %v1525 = vadd.f32 %v1281, %v1444
        %v1526 = vadd.f32 %v1282, %v1518
        %v1527 = vld [vmem:[#allocation9] sm:$0x7]
        %v1529 = vlaneseq
        %v1530 = vshrl.u32 %v1529, 7
        %v1531 = vsub.s32 0, %v1530
        %v1532 = vrot.slane %v1527, %v1531
        %v1533 = vlaneseq
        %v1534 = vshrl.u32 %v1533, 7
        %v1535 = vsub.s32 1, %v1534
        %v1536 = vrot.slane %v1527, %v1535
        %v1537 = vlaneseq
        %v1538 = vshrl.u32 %v1537, 7
        %v1539 = vsub.s32 2, %v1538
        %v1540 = vrot.slane %v1527, %v1539
        %v1544 = vadd.f32 %v1521, %v1532
        %v1545 = vadd.f32 %v1522, %v1536
        %v1546 = vadd.f32 %v1523, %v1540
        %v1547 = vadd.f32 %v1524, %v1532
        %v1548 = vadd.f32 %v1525, %v1536
        %v1549 = vadd.f32 %v1526, %v1540
        %v1550 = vmax.f32 %v1544, 0.0
        %v1551 = vmax.f32 %v1545, 0.0
        %v1552 = vmax.f32 %v1546, 0.0
        %v1553 = vmax.f32 %v1547, 0.0
        %v1554 = vmax.f32 %v1548, 0.0
        %v1555 = vmax.f32 %v1549, 0.0
        %1556 = vst [vmem:[#allocation3] sm:$0xff] 0.0
        %1557 = vst [vmem:[#allocation3 + $0x8] sm:$0xff] 0.0
        %1558 = vst [vmem:[#allocation3 + $0x10] sm:$0xff] 0.0
        %vm1559 = vcmask 392192
        %1560 = vst.msk [vmem:[#allocation3 + $0x18] sm:$0xff] %vm1559, 0.0
        %1561 = vst [vmem:[#allocation3 + $0x20] sm:$0xff] 0.0
        %1562 = vst [vmem:[#allocation3 + $0x28] sm:$0xff] 0.0
        %1563 = vst [vmem:[#allocation3 + $0x30] sm:$0xff] 0.0
        %1564 = vst.msk [vmem:[#allocation3 + $0x38] sm:$0xff] %vm1559, 0.0
        %1565 = vst [vmem:[#allocation3 + $0x40] sm:$0x3] 0.0
        %1566 = vst [vmem:[#allocation3 + $0x48] sm:$0x3] 0.0
        %1567 = vst [vmem:[#allocation3 + $0x50] sm:$0x3] 0.0
        %vm1568 = vcmask 386048
        %1569 = vst.msk [vmem:[#allocation3 + $0x58] sm:$0x3] %vm1568, 0.0
        %vm1576 = vcmask 1040384
        %v1577 = vrot.slane %v1550, 7
        %v1578 = vrot.slane %v1551, 7
        %v1579 = vrot.slane %v1552, 7
        %v1580 = vrot.slane %v1553, 7
        %v1581 = vsel %vm1576, %v1577, %v1580
        %v1582 = vrot.slane %v1554, 7
        %v1583 = vsel %vm1576, %v1578, %v1582
        %v1584 = vrot.slane %v1555, 7
        %v1585 = vsel %vm1576, %v1579, %v1584
        %1586 = vrot.lane.b32.xlu0 %v1577, 24
        %v1587 = vpop.permute.xlu0 %1586
        %1588 = vrot.lane.b32.xlu0 %v1578, 24
        %v1589 = vpop.permute.xlu0 %1588
        %1590 = vrot.lane.b32.xlu0 %v1579, 24
        %v1591 = vpop.permute.xlu0 %1590
        %1592 = vrot.lane.b32.xlu0 %v1581, 24
        %v1593 = vpop.permute.xlu0 %1592
        %1594 = vrot.lane.b32.xlu0 %v1583, 24
        %v1595 = vpop.permute.xlu0 %1594
        %1596 = vrot.lane.b32.xlu0 %v1585, 24
        %v1597 = vpop.permute.xlu0 %1596
        %1598 = vrot.lane.b32.xlu0 %v1580, 24
        %v1599 = vpop.permute.xlu0 %1598
        %1600 = vrot.lane.b32.xlu0 %v1582, 24
        %v1601 = vpop.permute.xlu0 %1600
        %1602 = vrot.lane.b32.xlu0 %v1584, 24
        %v1603 = vpop.permute.xlu0 %1602
        %vm1604 = vcmask 195584
        %v1605 = vsel %vm1604, %v1587, %v1589
        %v1606 = vsel %vm1604, %v1589, %v1591
        %v1607 = vsel %vm1604, %v1593, %v1595
        %v1608 = vsel %vm1604, %v1595, %v1597
        %v1609 = vsel %vm1604, %v1599, %v1601
        %v1610 = vsel %vm1604, %v1601, %v1603
        %vm1623 = vcmask 1047745
        %1624 = vst.msk [vmem:[#allocation3] sm:$0xfe] %vm1623, %v1587
        %1625 = vst [vmem:[#allocation3 + $0x8] sm:$0xfe] %v1605
        %1626 = vst [vmem:[#allocation3 + $0x10] sm:$0xfe] %v1606
        %vm1627 = vcmask 195585
        %1628 = vst.msk [vmem:[#allocation3 + $0x18] sm:$0xfe] %vm1627, %v1591
        %vm1629 = vcmask 1047744
        %1630 = vst.msk [vmem:[#allocation3 + $0x20] sm:$0xff] %vm1629, %v1593
        %1631 = vst [vmem:[#allocation3 + $0x28] sm:$0xff] %v1607
        %1632 = vst [vmem:[#allocation3 + $0x30] sm:$0xff] %v1608
        %1633 = vst.msk [vmem:[#allocation3 + $0x38] sm:$0xff] %vm1604, %v1597
        %vm1634 = vcmask 1040576
        %1635 = vst.msk [vmem:[#allocation3 + $0x40] sm:$0x1] %vm1634, %v1599
        %1636 = vst [vmem:[#allocation3 + $0x48] sm:$0x1] %v1609
        %1637 = vst [vmem:[#allocation3 + $0x50] sm:$0x1] %v1610
        %vm1638 = vcmask 188416
        %1639 = vst.msk [vmem:[#allocation3 + $0x58] sm:$0x1] %vm1638, %v1603
        %v1640 = vld [vmem:[#allocation3] sm:$0xff]
        %v1641 = vld [vmem:[#allocation3 + $0x8] sm:$0xff]
        %v1642 = vld [vmem:[#allocation3 + $0x10] sm:$0xff]
        %v1643 = vld [vmem:[#allocation3 + $0x18] sm:$0xff]
        %v1644 = vld [vmem:[#allocation3 + $0x20] sm:$0xff]
        %v1645 = vld [vmem:[#allocation3 + $0x28] sm:$0xff]
        %v1646 = vld [vmem:[#allocation3 + $0x30] sm:$0xff]
        %v1647 = vld [vmem:[#allocation3 + $0x38] sm:$0xff]
        %v1648 = vld [vmem:[#allocation10] sm:$0xff]
        %v1649 = vld [vmem:[#allocation10 + $0x8] sm:$0xff]
        %v1650 = vld [vmem:[#allocation10 + $0x10] sm:$0xff]
        %v1651 = vld [vmem:[#allocation10 + $0x18] sm:$0xff]
        %v1652 = vld [vmem:[#allocation10 + $0x20] sm:$0xff]
        %v1653 = vld [vmem:[#allocation10 + $0x28] sm:$0xff]
        %v1654 = vld [vmem:[#allocation10 + $0x30] sm:$0xff]
        %v1655 = vld [vmem:[#allocation10 + $0x38] sm:$0xff]
        %v1656 = vld [vmem:[#allocation10 + $0x40] sm:$0xff]
        %v1657 = vld [vmem:[#allocation10 + $0x48] sm:$0xff]
        %v1658 = vld [vmem:[#allocation10 + $0x50] sm:$0xff]
        %v1659 = vld [vmem:[#allocation10 + $0x58] sm:$0xff]
        %v1660 = vld [vmem:[#allocation10 + $0x60] sm:$0xff]
        %v1661 = vld [vmem:[#allocation10 + $0x68] sm:$0xff]
        %v1662 = vld [vmem:[#allocation10 + $0x70] sm:$0xff]
        %v1663 = vld [vmem:[#allocation10 + $0x78] sm:$0xff]
        %v1664 = vld [vmem:[#allocation10 + $0x80] sm:$0xff]
        %v1665 = vld [vmem:[#allocation10 + $0x88] sm:$0xff]
        %v1666 = vld [vmem:[#allocation10 + $0x90] sm:$0xff]
        %v1667 = vld [vmem:[#allocation10 + $0x98] sm:$0xff]
        %v1668 = vld [vmem:[#allocation10 + $0xa0] sm:$0xff]
        %v1669 = vld [vmem:[#allocation10 + $0xa8] sm:$0xff]
        %v1670 = vld [vmem:[#allocation10 + $0xb0] sm:$0xff]
        %v1671 = vld [vmem:[#allocation10 + $0xb8] sm:$0xff]
        %v1672 = vld [vmem:[#allocation10 + $0xc0] sm:$0xff]
        %v1673 = vld [vmem:[#allocation10 + $0xc8] sm:$0xff]
        %v1674 = vld [vmem:[#allocation10 + $0xd0] sm:$0xff]
        %v1675 = vld [vmem:[#allocation10 + $0xd8] sm:$0xff]
        %v1676 = vld [vmem:[#allocation10 + $0xe0] sm:$0xff]
        %v1677 = vld [vmem:[#allocation10 + $0xe8] sm:$0xff]
        %v1678 = vld [vmem:[#allocation10 + $0xf0] sm:$0xff]
        %v1679 = vld [vmem:[#allocation10 + $0xf8] sm:$0xff]
        %v1680 = vld [vmem:[#allocation10 + $0x100] sm:$0xff]
        %v1681 = vld [vmem:[#allocation10 + $0x108] sm:$0xff]
        %v1682 = vld [vmem:[#allocation10 + $0x110] sm:$0xff]
        %v1683 = vld [vmem:[#allocation10 + $0x118] sm:$0xff]
        %v1684 = vld [vmem:[#allocation10 + $0x120] sm:$0xff]
        %v1685 = vld [vmem:[#allocation10 + $0x128] sm:$0xff]
        %v1686 = vld [vmem:[#allocation10 + $0x130] sm:$0xff]
        %v1687 = vld [vmem:[#allocation10 + $0x138] sm:$0xff]
        %v1688 = vld [vmem:[#allocation10 + $0x140] sm:$0xff]
        %v1689 = vld [vmem:[#allocation10 + $0x148] sm:$0xff]
        %v1690 = vld [vmem:[#allocation10 + $0x150] sm:$0xff]
        %v1691 = vld [vmem:[#allocation10 + $0x158] sm:$0xff]
        %v1692 = vld [vmem:[#allocation10 + $0x160] sm:$0xff]
        %v1693 = vld [vmem:[#allocation10 + $0x168] sm:$0xff]
        %v1694 = vld [vmem:[#allocation10 + $0x170] sm:$0xff]
        %v1695 = vld [vmem:[#allocation10 + $0x178] sm:$0xff]
        %v1696 = vld [vmem:[#allocation10 + $0x180] sm:$0xff]
        %v1697 = vld [vmem:[#allocation10 + $0x188] sm:$0xff]
        %v1698 = vld [vmem:[#allocation10 + $0x190] sm:$0xff]
        %v1699 = vld [vmem:[#allocation10 + $0x198] sm:$0xff]
        %v1700 = vld [vmem:[#allocation10 + $0x1a0] sm:$0xff]
        %v1701 = vld [vmem:[#allocation10 + $0x1a8] sm:$0xff]
        %v1702 = vld [vmem:[#allocation3] sm:$0xfe]
        %v1703 = vld [vmem:[#allocation3 + $0x8] sm:$0xfe]
        %v1704 = vld [vmem:[#allocation3 + $0x10] sm:$0xfe]
        %v1705 = vld [vmem:[#allocation3 + $0x18] sm:$0xfe]
        %v1706 = vld [vmem:[#allocation3 + $0x40] sm:$0x1]
        %v1707 = vld [vmem:[#allocation3 + $0x48] sm:$0x1]
        %v1708 = vld [vmem:[#allocation3 + $0x50] sm:$0x1]
        %v1709 = vld [vmem:[#allocation3 + $0x58] sm:$0x1]
        %s1710 = scalar_lea.vmem [#allocation10], 432
        %v1711 = vld [vmem:[%s1710] sm:$0xff]
        %v1712 = vld [vmem:[%s1710 + $0x8] sm:$0xff]
        %v1713 = vld [vmem:[%s1710 + $0x10] sm:$0xff]
        %v1714 = vld [vmem:[%s1710 + $0x18] sm:$0xff]
        %v1715 = vld [vmem:[%s1710 + $0x20] sm:$0xff]
        %v1716 = vld [vmem:[%s1710 + $0x28] sm:$0xff]
        %v1717 = vld [vmem:[%s1710 + $0x30] sm:$0xff]
        %v1718 = vld [vmem:[%s1710 + $0x38] sm:$0xff]
        %v1719 = vld [vmem:[%s1710 + $0x40] sm:$0xff]
        %v1720 = vld [vmem:[%s1710 + $0x48] sm:$0xff]
        %v1721 = vld [vmem:[%s1710 + $0x50] sm:$0xff]
        %v1722 = vld [vmem:[%s1710 + $0x58] sm:$0xff]
        %v1723 = vld [vmem:[%s1710 + $0x60] sm:$0xff]
        %v1724 = vld [vmem:[%s1710 + $0x68] sm:$0xff]
        %v1725 = vld [vmem:[%s1710 + $0x70] sm:$0xff]
        %v1726 = vld [vmem:[%s1710 + $0x78] sm:$0xff]
        %v1727 = vld [vmem:[%s1710 + $0x80] sm:$0xff]
        %v1728 = vld [vmem:[%s1710 + $0x88] sm:$0xff]
        %v1729 = vld [vmem:[%s1710 + $0x90] sm:$0xff]
        %v1730 = vld [vmem:[%s1710 + $0x98] sm:$0xff]
        %v1731 = vld [vmem:[%s1710 + $0xa0] sm:$0xff]
        %v1732 = vld [vmem:[%s1710 + $0xa8] sm:$0xff]
        %v1733 = vld [vmem:[%s1710 + $0xb0] sm:$0xff]
        %v1734 = vld [vmem:[%s1710 + $0xb8] sm:$0xff]
        %v1735 = vld [vmem:[%s1710 + $0xc0] sm:$0xff]
        %v1736 = vld [vmem:[%s1710 + $0xc8] sm:$0xff]
        %v1737 = vld [vmem:[%s1710 + $0xd0] sm:$0xff]
        %v1738 = vld [vmem:[%s1710 + $0xd8] sm:$0xff]
        %v1739 = vld [vmem:[%s1710 + $0xe0] sm:$0xff]
        %v1740 = vld [vmem:[%s1710 + $0xe8] sm:$0xff]
        %v1741 = vld [vmem:[%s1710 + $0xf0] sm:$0xff]
        %v1742 = vld [vmem:[%s1710 + $0xf8] sm:$0xff]
        %v1743 = vld [vmem:[%s1710 + $0x100] sm:$0xff]
        %v1744 = vld [vmem:[%s1710 + $0x108] sm:$0xff]
        %v1745 = vld [vmem:[%s1710 + $0x110] sm:$0xff]
        %v1746 = vld [vmem:[%s1710 + $0x118] sm:$0xff]
        %v1747 = vld [vmem:[%s1710 + $0x120] sm:$0xff]
        %v1748 = vld [vmem:[%s1710 + $0x128] sm:$0xff]
        %v1749 = vld [vmem:[%s1710 + $0x130] sm:$0xff]
        %v1750 = vld [vmem:[%s1710 + $0x138] sm:$0xff]
        %v1751 = vld [vmem:[%s1710 + $0x140] sm:$0xff]
        %v1752 = vld [vmem:[%s1710 + $0x148] sm:$0xff]
        %v1753 = vld [vmem:[%s1710 + $0x150] sm:$0xff]
        %v1754 = vld [vmem:[%s1710 + $0x158] sm:$0xff]
        %v1755 = vld [vmem:[%s1710 + $0x160] sm:$0xff]
        %v1756 = vld [vmem:[%s1710 + $0x168] sm:$0xff]
        %v1757 = vld [vmem:[%s1710 + $0x170] sm:$0xff]
        %v1758 = vld [vmem:[%s1710 + $0x178] sm:$0xff]
        %v1759 = vld [vmem:[%s1710 + $0x180] sm:$0xff]
        %v1760 = vld [vmem:[%s1710 + $0x188] sm:$0xff]
        %v1761 = vld [vmem:[%s1710 + $0x190] sm:$0xff]
        %v1762 = vld [vmem:[%s1710 + $0x198] sm:$0xff]
        %v1763 = vld [vmem:[%s1710 + $0x1a0] sm:$0xff]
        %v1764 = vld [vmem:[%s1710 + $0x1a8] sm:$0xff]
        %v1777 = vrot.slane %v1702, 1
        %v1778 = vrot.slane %v1644, 1
        %v1779 = vsel %vm469, %v1777, %v1778
        %v1780 = vrot.slane %v1703, 1
        %v1781 = vrot.slane %v1645, 1
        %v1782 = vsel %vm469, %v1780, %v1781
        %v1783 = vrot.slane %v1704, 1
        %v1784 = vrot.slane %v1646, 1
        %v1785 = vsel %vm469, %v1783, %v1784
        %v1786 = vrot.slane %v1705, 1
        %v1787 = vrot.slane %v1647, 1
        %v1788 = vsel %vm469, %v1786, %v1787
        %v1789 = vrot.slane %v1706, 1
        %v1790 = vsel %vm469, %v1778, %v1789
        %v1791 = vrot.slane %v1707, 1
        %v1792 = vsel %vm469, %v1781, %v1791
        %v1793 = vrot.slane %v1708, 1
        %v1794 = vsel %vm469, %v1784, %v1793
        %v1795 = vrot.slane %v1709, 1
        %v1796 = vsel %vm469, %v1787, %v1795
        %v1803 = vsel %vm1559, %v1788, 0
        %v1805 = vsel %vm1559, %v1796, 0
        %1807 = vmatprep.subr.mxu0 0.0
        %1808 = vmatpush1.msra.mxu0 %v1726
        %1809 = vmatprep.subr.mxu0 0.0
        %1810 = vmatpush1.msra.mxu0 %v1725
        %1811 = vmatprep.subr.mxu0 0.0
        %1812 = vmatpush1.msra.mxu0 %v1724
        %1813 = vmatprep.subr.mxu0 0.0
        %1814 = vmatpush1.msra.mxu0 %v1723
        %1815 = vmatprep.subr.mxu0 0.0
        %1816 = vmatpush1.msra.mxu0 %v1722
        %1817 = vmatprep.subr.mxu0 0.0
        %1818 = vmatpush1.msra.mxu0 %v1721
        %1819 = vmatprep.subr.mxu0 0.0
        %1820 = vmatpush1.msra.mxu0 %v1720
        %1821 = vmatprep.subr.mxu0 0.0
        %1822 = vmatpush1.msra.mxu0 %v1719
        %1823 = vmatprep.subr.mxu0 0.0
        %1824 = vmatpush1.msra.mxu0 %v1718
        %1825 = vmatprep.subr.mxu0 0.0
        %1826 = vmatpush1.msra.mxu0 %v1717
        %1827 = vmatprep.subr.mxu0 0.0
        %1828 = vmatpush1.msra.mxu0 %v1716
        %1829 = vmatprep.subr.mxu0 0.0
        %1830 = vmatpush1.msra.mxu0 %v1715
        %1831 = vmatprep.subr.mxu0 0.0
        %1832 = vmatpush1.msra.mxu0 %v1714
        %1833 = vmatprep.subr.mxu0 0.0
        %1834 = vmatpush1.msra.mxu0 %v1713
        %1835 = vmatprep.subr.mxu0 0.0
        %1836 = vmatpush1.msra.mxu0 %v1712
        %1837 = vmatprep.subr.mxu0 0.0
        %1838 = vmatpush1.msra.mxu0 %v1711
        %1839 = vmatprep.subr.mxu0 0.0
        %1840 = vmatpush2.msra.mxu0 %v1742
        %1841 = vmatprep.subr.mxu0 0.0
        %1842 = vmatpush2.msra.mxu0 %v1741
        %1843 = vmatprep.subr.mxu0 0.0
        %1844 = vmatpush2.msra.mxu0 %v1740
        %1845 = vmatprep.subr.mxu0 0.0
        %1846 = vmatpush2.msra.mxu0 %v1739
        %1847 = vmatprep.subr.mxu0 0.0
        %1848 = vmatpush2.msra.mxu0 %v1738
        %1849 = vmatprep.subr.mxu0 0.0
        %1850 = vmatpush2.msra.mxu0 %v1737
        %1851 = vmatprep.subr.mxu0 0.0
        %1852 = vmatpush2.msra.mxu0 %v1736
        %1853 = vmatprep.subr.mxu0 0.0
        %1854 = vmatpush2.msra.mxu0 %v1735
        %1855 = vmatprep.subr.mxu0 0.0
        %1856 = vmatpush2.msra.mxu0 %v1734
        %1857 = vmatprep.subr.mxu0 0.0
        %1858 = vmatpush2.msra.mxu0 %v1733
        %1859 = vmatprep.subr.mxu0 0.0
        %1860 = vmatpush2.msra.mxu0 %v1732
        %1861 = vmatprep.subr.mxu0 0.0
        %1862 = vmatpush2.msra.mxu0 %v1731
        %1863 = vmatprep.subr.mxu0 0.0
        %1864 = vmatpush2.msra.mxu0 %v1730
        %1865 = vmatprep.subr.mxu0 0.0
        %1866 = vmatpush2.msra.mxu0 %v1729
        %1867 = vmatprep.subr.mxu0 0.0
        %1868 = vmatpush2.msra.mxu0 %v1728
        %1869 = vmatprep.subr.mxu0 0.0
        %1870 = vmatpush2.msra.mxu0 %v1727
        %1871 = vmatprep.mubr.f32.mxu0 %v1782
        %1872 = vmatmul.mubr.f32.gmra.mxu0 %v1779
        %v1873 = vpop.f32.mrf.mxu0
        %v1874 = vadd.f32 0.0, %v1873
        %v1875 = vpop.f32.mrf.mxu0
        %1876 = vmatprep.mubr.f32.mxu0 %v1792
        %1877 = vmatmul.mubr.f32.gmra.mxu0 %v1790
        %v1878 = vpop.f32.mrf.mxu0
        %v1879 = vadd.f32 0.0, %v1878
        %v1880 = vpop.f32.mrf.mxu0
        %1881 = vdwg.mxu0
        %1882 = vmatprep.subr.mxu0 0.0
        %1883 = vmatpush1.msra.mxu0 %v1758
        %1884 = vmatprep.subr.mxu0 0.0
        %1885 = vmatpush1.msra.mxu0 %v1757
        %1886 = vmatprep.subr.mxu0 0.0
        %1887 = vmatpush1.msra.mxu0 %v1756
        %1888 = vmatprep.subr.mxu0 0.0
        %1889 = vmatpush1.msra.mxu0 %v1755
        %1890 = vmatprep.subr.mxu0 0.0
        %1891 = vmatpush1.msra.mxu0 %v1754
        %1892 = vmatprep.subr.mxu0 0.0
        %1893 = vmatpush1.msra.mxu0 %v1753
        %1894 = vmatprep.subr.mxu0 0.0
        %1895 = vmatpush1.msra.mxu0 %v1752
        %1896 = vmatprep.subr.mxu0 0.0
        %1897 = vmatpush1.msra.mxu0 %v1751
        %1898 = vmatprep.subr.mxu0 0.0
        %1899 = vmatpush1.msra.mxu0 %v1750
        %1900 = vmatprep.subr.mxu0 0.0
        %1901 = vmatpush1.msra.mxu0 %v1749
        %1902 = vmatprep.subr.mxu0 0.0
        %1903 = vmatpush1.msra.mxu0 %v1748
        %1904 = vmatprep.subr.mxu0 0.0
        %1905 = vmatpush1.msra.mxu0 %v1747
        %1906 = vmatprep.subr.mxu0 0.0
        %1907 = vmatpush1.msra.mxu0 %v1746
        %1908 = vmatprep.subr.mxu0 0.0
        %1909 = vmatpush1.msra.mxu0 %v1745
        %1910 = vmatprep.subr.mxu0 0.0
        %1911 = vmatpush1.msra.mxu0 %v1744
        %1912 = vmatprep.subr.mxu0 0.0
        %1913 = vmatpush1.msra.mxu0 %v1743
        %1914 = vmatprep.subr.mxu0 0.0
        %1915 = vmatpush2.msra.mxu0 0.0
        %1916 = vmatprep.subr.mxu0 0.0
        %1917 = vmatpush2.msra.mxu0 0.0
        %1918 = vmatprep.subr.mxu0 0.0
        %1919 = vmatpush2.msra.mxu0 0.0
        %1920 = vmatprep.subr.mxu0 0.0
        %1921 = vmatpush2.msra.mxu0 0.0
        %1922 = vmatprep.subr.mxu0 0.0
        %1923 = vmatpush2.msra.mxu0 0.0
        %1924 = vmatprep.subr.mxu0 0.0
        %1925 = vmatpush2.msra.mxu0 0.0
        %1926 = vmatprep.subr.mxu0 0.0
        %1927 = vmatpush2.msra.mxu0 0.0
        %1928 = vmatprep.subr.mxu0 0.0
        %1929 = vmatpush2.msra.mxu0 0.0
        %1930 = vmatprep.subr.mxu0 0.0
        %1931 = vmatpush2.msra.mxu0 0.0
        %1932 = vmatprep.subr.mxu0 0.0
        %1933 = vmatpush2.msra.mxu0 0.0
        %1934 = vmatprep.subr.mxu0 0.0
        %1935 = vmatpush2.msra.mxu0 %v1764
        %1936 = vmatprep.subr.mxu0 0.0
        %1937 = vmatpush2.msra.mxu0 %v1763
        %1938 = vmatprep.subr.mxu0 0.0
        %1939 = vmatpush2.msra.mxu0 %v1762
        %1940 = vmatprep.subr.mxu0 0.0
        %1941 = vmatpush2.msra.mxu0 %v1761
        %1942 = vmatprep.subr.mxu0 0.0
        %1943 = vmatpush2.msra.mxu0 %v1760
        %1944 = vmatprep.subr.mxu0 0.0
        %1945 = vmatpush2.msra.mxu0 %v1759
        %1946 = vmatprep.mubr.f32.mxu0 %v1803
        %1947 = vmatmul.mubr.f32.gmra.mxu0 %v1785
        %v1948 = vpop.f32.mrf.mxu0
        %v1949 = vadd.f32 %v1874, %v1948
        %v1950 = vpop.f32.mrf.mxu0
        %1951 = vmatprep.mubr.f32.mxu0 %v1805
        %1952 = vmatmul.mubr.f32.gmra.mxu0 %v1794
        %v1953 = vpop.f32.mrf.mxu0
        %v1954 = vadd.f32 %v1879, %v1953
        %v1955 = vpop.f32.mrf.mxu0
        %1956 = vdwg.mxu0
        %v1958 = vsel %vm1559, %v1643, 0
        %v1960 = vsel %vm1559, %v1647, 0
        %1962 = vmatprep.subr.mxu0 0.0
        %1963 = vmatpush1.msra.mxu0 %v1663
        %1964 = vmatprep.subr.mxu0 0.0
        %1965 = vmatpush1.msra.mxu0 %v1662
        %1966 = vmatprep.subr.mxu0 0.0
        %1967 = vmatpush1.msra.mxu0 %v1661
        %1968 = vmatprep.subr.mxu0 0.0
        %1969 = vmatpush1.msra.mxu0 %v1660
        %1970 = vmatprep.subr.mxu0 0.0
        %1971 = vmatpush1.msra.mxu0 %v1659
        %1972 = vmatprep.subr.mxu0 0.0
        %1973 = vmatpush1.msra.mxu0 %v1658
        %1974 = vmatprep.subr.mxu0 0.0
        %1975 = vmatpush1.msra.mxu0 %v1657
        %1976 = vmatprep.subr.mxu0 0.0
        %1977 = vmatpush1.msra.mxu0 %v1656
        %1978 = vmatprep.subr.mxu0 0.0
        %1979 = vmatpush1.msra.mxu0 %v1655
        %1980 = vmatprep.subr.mxu0 0.0
        %1981 = vmatpush1.msra.mxu0 %v1654
        %1982 = vmatprep.subr.mxu0 0.0
        %1983 = vmatpush1.msra.mxu0 %v1653
        %1984 = vmatprep.subr.mxu0 0.0
        %1985 = vmatpush1.msra.mxu0 %v1652
        %1986 = vmatprep.subr.mxu0 0.0
        %1987 = vmatpush1.msra.mxu0 %v1651
        %1988 = vmatprep.subr.mxu0 0.0
        %1989 = vmatpush1.msra.mxu0 %v1650
        %1990 = vmatprep.subr.mxu0 0.0
        %1991 = vmatpush1.msra.mxu0 %v1649
        %1992 = vmatprep.subr.mxu0 0.0
        %1993 = vmatpush1.msra.mxu0 %v1648
        %1994 = vmatprep.subr.mxu0 0.0
        %1995 = vmatpush2.msra.mxu0 %v1679
        %1996 = vmatprep.subr.mxu0 0.0
        %1997 = vmatpush2.msra.mxu0 %v1678
        %1998 = vmatprep.subr.mxu0 0.0
        %1999 = vmatpush2.msra.mxu0 %v1677
        %2000 = vmatprep.subr.mxu0 0.0
        %2001 = vmatpush2.msra.mxu0 %v1676
        %2002 = vmatprep.subr.mxu0 0.0
        %2003 = vmatpush2.msra.mxu0 %v1675
        %2004 = vmatprep.subr.mxu0 0.0
        %2005 = vmatpush2.msra.mxu0 %v1674
        %2006 = vmatprep.subr.mxu0 0.0
        %2007 = vmatpush2.msra.mxu0 %v1673
        %2008 = vmatprep.subr.mxu0 0.0
        %2009 = vmatpush2.msra.mxu0 %v1672
        %2010 = vmatprep.subr.mxu0 0.0
        %2011 = vmatpush2.msra.mxu0 %v1671
        %2012 = vmatprep.subr.mxu0 0.0
        %2013 = vmatpush2.msra.mxu0 %v1670
        %2014 = vmatprep.subr.mxu0 0.0
        %2015 = vmatpush2.msra.mxu0 %v1669
        %2016 = vmatprep.subr.mxu0 0.0
        %2017 = vmatpush2.msra.mxu0 %v1668
        %2018 = vmatprep.subr.mxu0 0.0
        %2019 = vmatpush2.msra.mxu0 %v1667
        %2020 = vmatprep.subr.mxu0 0.0
        %2021 = vmatpush2.msra.mxu0 %v1666
        %2022 = vmatprep.subr.mxu0 0.0
        %2023 = vmatpush2.msra.mxu0 %v1665
        %2024 = vmatprep.subr.mxu0 0.0
        %2025 = vmatpush2.msra.mxu0 %v1664
        %2026 = vmatprep.mubr.f32.mxu0 %v1641
        %2027 = vmatmul.mubr.f32.gmra.mxu0 %v1640
        %v2028 = vpop.f32.mrf.mxu0
        %v2029 = vadd.f32 %v1949, %v2028
        %v2030 = vpop.f32.mrf.mxu0
        %2031 = vmatprep.mubr.f32.mxu0 %v1645
        %2032 = vmatmul.mubr.f32.gmra.mxu0 %v1644
        %v2033 = vpop.f32.mrf.mxu0
        %v2034 = vadd.f32 %v1954, %v2033
        %v2035 = vpop.f32.mrf.mxu0
        %2036 = vdwg.mxu0
        %2037 = vmatprep.subr.mxu0 0.0
        %2038 = vmatpush1.msra.mxu0 %v1695
        %2039 = vmatprep.subr.mxu0 0.0
        %2040 = vmatpush1.msra.mxu0 %v1694
        %2041 = vmatprep.subr.mxu0 0.0
        %2042 = vmatpush1.msra.mxu0 %v1693
        %2043 = vmatprep.subr.mxu0 0.0
        %2044 = vmatpush1.msra.mxu0 %v1692
        %2045 = vmatprep.subr.mxu0 0.0
        %2046 = vmatpush1.msra.mxu0 %v1691
        %2047 = vmatprep.subr.mxu0 0.0
        %2048 = vmatpush1.msra.mxu0 %v1690
        %2049 = vmatprep.subr.mxu0 0.0
        %2050 = vmatpush1.msra.mxu0 %v1689
        %2051 = vmatprep.subr.mxu0 0.0
        %2052 = vmatpush1.msra.mxu0 %v1688
        %2053 = vmatprep.subr.mxu0 0.0
        %2054 = vmatpush1.msra.mxu0 %v1687
        %2055 = vmatprep.subr.mxu0 0.0
        %2056 = vmatpush1.msra.mxu0 %v1686
        %2057 = vmatprep.subr.mxu0 0.0
        %2058 = vmatpush1.msra.mxu0 %v1685
        %2059 = vmatprep.subr.mxu0 0.0
        %2060 = vmatpush1.msra.mxu0 %v1684
        %2061 = vmatprep.subr.mxu0 0.0
        %2062 = vmatpush1.msra.mxu0 %v1683
        %2063 = vmatprep.subr.mxu0 0.0
        %2064 = vmatpush1.msra.mxu0 %v1682
        %2065 = vmatprep.subr.mxu0 0.0
        %2066 = vmatpush1.msra.mxu0 %v1681
        %2067 = vmatprep.subr.mxu0 0.0
        %2068 = vmatpush1.msra.mxu0 %v1680
        %2069 = vmatprep.subr.mxu0 0.0
        %2070 = vmatpush2.msra.mxu0 0.0
        %2071 = vmatprep.subr.mxu0 0.0
        %2072 = vmatpush2.msra.mxu0 0.0
        %2073 = vmatprep.subr.mxu0 0.0
        %2074 = vmatpush2.msra.mxu0 0.0
        %2075 = vmatprep.subr.mxu0 0.0
        %2076 = vmatpush2.msra.mxu0 0.0
        %2077 = vmatprep.subr.mxu0 0.0
        %2078 = vmatpush2.msra.mxu0 0.0
        %2079 = vmatprep.subr.mxu0 0.0
        %2080 = vmatpush2.msra.mxu0 0.0
        %2081 = vmatprep.subr.mxu0 0.0
        %2082 = vmatpush2.msra.mxu0 0.0
        %2083 = vmatprep.subr.mxu0 0.0
        %2084 = vmatpush2.msra.mxu0 0.0
        %2085 = vmatprep.subr.mxu0 0.0
        %2086 = vmatpush2.msra.mxu0 0.0
        %2087 = vmatprep.subr.mxu0 0.0
        %2088 = vmatpush2.msra.mxu0 0.0
        %2089 = vmatprep.subr.mxu0 0.0
        %2090 = vmatpush2.msra.mxu0 %v1701
        %2091 = vmatprep.subr.mxu0 0.0
        %2092 = vmatpush2.msra.mxu0 %v1700
        %2093 = vmatprep.subr.mxu0 0.0
        %2094 = vmatpush2.msra.mxu0 %v1699
        %2095 = vmatprep.subr.mxu0 0.0
        %2096 = vmatpush2.msra.mxu0 %v1698
        %2097 = vmatprep.subr.mxu0 0.0
        %2098 = vmatpush2.msra.mxu0 %v1697
        %2099 = vmatprep.subr.mxu0 0.0
        %2100 = vmatpush2.msra.mxu0 %v1696
        %2101 = vmatprep.mubr.f32.mxu0 %v1958
        %2102 = vmatmul.mubr.f32.gmra.mxu0 %v1642
        %v2103 = vpop.f32.mrf.mxu0
        %v2104 = vadd.f32 %v2029, %v2103
        %v2105 = vpop.f32.mrf.mxu0
        %2106 = vmatprep.mubr.f32.mxu0 %v1960
        %2107 = vmatmul.mubr.f32.gmra.mxu0 %v1646
        %v2108 = vpop.f32.mrf.mxu0
        %v2109 = vadd.f32 %v2034, %v2108
        %v2110 = vpop.f32.mrf.mxu0
        %2111 = vdwg.mxu0
        %v2112 = vld [vmem:[#allocation3] sm:$0xfc]
        %v2113 = vld [vmem:[#allocation3 + $0x8] sm:$0xfc]
        %v2114 = vld [vmem:[#allocation3 + $0x10] sm:$0xfc]
        %v2115 = vld [vmem:[#allocation3 + $0x18] sm:$0xfc]
        %v2116 = vld [vmem:[#allocation3 + $0x40] sm:$0x3]
        %v2117 = vld [vmem:[#allocation3 + $0x48] sm:$0x3]
        %v2118 = vld [vmem:[#allocation3 + $0x50] sm:$0x3]
        %v2119 = vld [vmem:[#allocation3 + $0x58] sm:$0x3]
        %s2120 = scalar_lea.vmem [#allocation10], 864
        %v2121 = vld [vmem:[%s2120] sm:$0xff]
        %v2122 = vld [vmem:[%s2120 + $0x8] sm:$0xff]
        %v2123 = vld [vmem:[%s2120 + $0x10] sm:$0xff]
        %v2124 = vld [vmem:[%s2120 + $0x18] sm:$0xff]
        %v2125 = vld [vmem:[%s2120 + $0x20] sm:$0xff]
        %v2126 = vld [vmem:[%s2120 + $0x28] sm:$0xff]
        %v2127 = vld [vmem:[%s2120 + $0x30] sm:$0xff]
        %v2128 = vld [vmem:[%s2120 + $0x38] sm:$0xff]
        %v2129 = vld [vmem:[%s2120 + $0x40] sm:$0xff]
        %v2130 = vld [vmem:[%s2120 + $0x48] sm:$0xff]
        %v2131 = vld [vmem:[%s2120 + $0x50] sm:$0xff]
        %v2132 = vld [vmem:[%s2120 + $0x58] sm:$0xff]
        %v2133 = vld [vmem:[%s2120 + $0x60] sm:$0xff]
        %v2134 = vld [vmem:[%s2120 + $0x68] sm:$0xff]
        %v2135 = vld [vmem:[%s2120 + $0x70] sm:$0xff]
        %v2136 = vld [vmem:[%s2120 + $0x78] sm:$0xff]
        %v2137 = vld [vmem:[%s2120 + $0x80] sm:$0xff]
        %v2138 = vld [vmem:[%s2120 + $0x88] sm:$0xff]
        %v2139 = vld [vmem:[%s2120 + $0x90] sm:$0xff]
        %v2140 = vld [vmem:[%s2120 + $0x98] sm:$0xff]
        %v2141 = vld [vmem:[%s2120 + $0xa0] sm:$0xff]
        %v2142 = vld [vmem:[%s2120 + $0xa8] sm:$0xff]
        %v2143 = vld [vmem:[%s2120 + $0xb0] sm:$0xff]
        %v2144 = vld [vmem:[%s2120 + $0xb8] sm:$0xff]
        %v2145 = vld [vmem:[%s2120 + $0xc0] sm:$0xff]
        %v2146 = vld [vmem:[%s2120 + $0xc8] sm:$0xff]
        %v2147 = vld [vmem:[%s2120 + $0xd0] sm:$0xff]
        %v2148 = vld [vmem:[%s2120 + $0xd8] sm:$0xff]
        %v2149 = vld [vmem:[%s2120 + $0xe0] sm:$0xff]
        %v2150 = vld [vmem:[%s2120 + $0xe8] sm:$0xff]
        %v2151 = vld [vmem:[%s2120 + $0xf0] sm:$0xff]
        %v2152 = vld [vmem:[%s2120 + $0xf8] sm:$0xff]
        %v2153 = vld [vmem:[%s2120 + $0x100] sm:$0xff]
        %v2154 = vld [vmem:[%s2120 + $0x108] sm:$0xff]
        %v2155 = vld [vmem:[%s2120 + $0x110] sm:$0xff]
        %v2156 = vld [vmem:[%s2120 + $0x118] sm:$0xff]
        %v2157 = vld [vmem:[%s2120 + $0x120] sm:$0xff]
        %v2158 = vld [vmem:[%s2120 + $0x128] sm:$0xff]
        %v2159 = vld [vmem:[%s2120 + $0x130] sm:$0xff]
        %v2160 = vld [vmem:[%s2120 + $0x138] sm:$0xff]
        %v2161 = vld [vmem:[%s2120 + $0x140] sm:$0xff]
        %v2162 = vld [vmem:[%s2120 + $0x148] sm:$0xff]
        %v2163 = vld [vmem:[%s2120 + $0x150] sm:$0xff]
        %v2164 = vld [vmem:[%s2120 + $0x158] sm:$0xff]
        %v2165 = vld [vmem:[%s2120 + $0x160] sm:$0xff]
        %v2166 = vld [vmem:[%s2120 + $0x168] sm:$0xff]
        %v2167 = vld [vmem:[%s2120 + $0x170] sm:$0xff]
        %v2168 = vld [vmem:[%s2120 + $0x178] sm:$0xff]
        %v2169 = vld [vmem:[%s2120 + $0x180] sm:$0xff]
        %v2170 = vld [vmem:[%s2120 + $0x188] sm:$0xff]
        %v2171 = vld [vmem:[%s2120 + $0x190] sm:$0xff]
        %v2172 = vld [vmem:[%s2120 + $0x198] sm:$0xff]
        %v2173 = vld [vmem:[%s2120 + $0x1a0] sm:$0xff]
        %v2174 = vld [vmem:[%s2120 + $0x1a8] sm:$0xff]
        %v2183 = vrot.slane %v2112, 2
        %v2184 = vrot.slane %v1644, 2
        %v2185 = vsel %vm864, %v2183, %v2184
        %v2186 = vrot.slane %v2113, 2
        %v2187 = vrot.slane %v1645, 2
        %v2188 = vsel %vm864, %v2186, %v2187
        %v2189 = vrot.slane %v2114, 2
        %v2190 = vrot.slane %v1646, 2
        %v2191 = vsel %vm864, %v2189, %v2190
        %v2192 = vrot.slane %v2115, 2
        %v2193 = vrot.slane %v1647, 2
        %v2194 = vsel %vm864, %v2192, %v2193
        %v2195 = vrot.slane %v2116, 2
        %v2196 = vsel %vm864, %v2184, %v2195
        %v2197 = vrot.slane %v2117, 2
        %v2198 = vsel %vm864, %v2187, %v2197
        %v2199 = vrot.slane %v2118, 2
        %v2200 = vsel %vm864, %v2190, %v2199
        %v2201 = vrot.slane %v2119, 2
        %v2202 = vsel %vm864, %v2193, %v2201
        %v2209 = vsel %vm1559, %v2194, 0
        %v2211 = vsel %vm1559, %v2202, 0
        %2213 = vmatprep.subr.mxu0 0.0
        %2214 = vmatpush1.msra.mxu0 %v2136
        %2215 = vmatprep.subr.mxu0 0.0
        %2216 = vmatpush1.msra.mxu0 %v2135
        %2217 = vmatprep.subr.mxu0 0.0
        %2218 = vmatpush1.msra.mxu0 %v2134
        %2219 = vmatprep.subr.mxu0 0.0
        %2220 = vmatpush1.msra.mxu0 %v2133
        %2221 = vmatprep.subr.mxu0 0.0
        %2222 = vmatpush1.msra.mxu0 %v2132
        %2223 = vmatprep.subr.mxu0 0.0
        %2224 = vmatpush1.msra.mxu0 %v2131
        %2225 = vmatprep.subr.mxu0 0.0
        %2226 = vmatpush1.msra.mxu0 %v2130
        %2227 = vmatprep.subr.mxu0 0.0
        %2228 = vmatpush1.msra.mxu0 %v2129
        %2229 = vmatprep.subr.mxu0 0.0
        %2230 = vmatpush1.msra.mxu0 %v2128
        %2231 = vmatprep.subr.mxu0 0.0
        %2232 = vmatpush1.msra.mxu0 %v2127
        %2233 = vmatprep.subr.mxu0 0.0
        %2234 = vmatpush1.msra.mxu0 %v2126
        %2235 = vmatprep.subr.mxu0 0.0
        %2236 = vmatpush1.msra.mxu0 %v2125
        %2237 = vmatprep.subr.mxu0 0.0
        %2238 = vmatpush1.msra.mxu0 %v2124
        %2239 = vmatprep.subr.mxu0 0.0
        %2240 = vmatpush1.msra.mxu0 %v2123
        %2241 = vmatprep.subr.mxu0 0.0
        %2242 = vmatpush1.msra.mxu0 %v2122
        %2243 = vmatprep.subr.mxu0 0.0
        %2244 = vmatpush1.msra.mxu0 %v2121
        %2245 = vmatprep.subr.mxu0 0.0
        %2246 = vmatpush2.msra.mxu0 %v2152
        %2247 = vmatprep.subr.mxu0 0.0
        %2248 = vmatpush2.msra.mxu0 %v2151
        %2249 = vmatprep.subr.mxu0 0.0
        %2250 = vmatpush2.msra.mxu0 %v2150
        %2251 = vmatprep.subr.mxu0 0.0
        %2252 = vmatpush2.msra.mxu0 %v2149
        %2253 = vmatprep.subr.mxu0 0.0
        %2254 = vmatpush2.msra.mxu0 %v2148
        %2255 = vmatprep.subr.mxu0 0.0
        %2256 = vmatpush2.msra.mxu0 %v2147
        %2257 = vmatprep.subr.mxu0 0.0
        %2258 = vmatpush2.msra.mxu0 %v2146
        %2259 = vmatprep.subr.mxu0 0.0
        %2260 = vmatpush2.msra.mxu0 %v2145
        %2261 = vmatprep.subr.mxu0 0.0
        %2262 = vmatpush2.msra.mxu0 %v2144
        %2263 = vmatprep.subr.mxu0 0.0
        %2264 = vmatpush2.msra.mxu0 %v2143
        %2265 = vmatprep.subr.mxu0 0.0
        %2266 = vmatpush2.msra.mxu0 %v2142
        %2267 = vmatprep.subr.mxu0 0.0
        %2268 = vmatpush2.msra.mxu0 %v2141
        %2269 = vmatprep.subr.mxu0 0.0
        %2270 = vmatpush2.msra.mxu0 %v2140
        %2271 = vmatprep.subr.mxu0 0.0
        %2272 = vmatpush2.msra.mxu0 %v2139
        %2273 = vmatprep.subr.mxu0 0.0
        %2274 = vmatpush2.msra.mxu0 %v2138
        %2275 = vmatprep.subr.mxu0 0.0
        %2276 = vmatpush2.msra.mxu0 %v2137
        %2277 = vmatprep.mubr.f32.mxu0 %v2188
        %2278 = vmatmul.mubr.f32.gmra.mxu0 %v2185
        %v2279 = vpop.f32.mrf.mxu0
        %v2280 = vadd.f32 0.0, %v2279
        %v2281 = vpop.f32.mrf.mxu0
        %2282 = vmatprep.mubr.f32.mxu0 %v2198
        %2283 = vmatmul.mubr.f32.gmra.mxu0 %v2196
        %v2284 = vpop.f32.mrf.mxu0
        %v2285 = vadd.f32 0.0, %v2284
        %v2286 = vpop.f32.mrf.mxu0
        %2287 = vdwg.mxu0
        %2288 = vmatprep.subr.mxu0 0.0
        %2289 = vmatpush1.msra.mxu0 %v2168
        %2290 = vmatprep.subr.mxu0 0.0
        %2291 = vmatpush1.msra.mxu0 %v2167
        %2292 = vmatprep.subr.mxu0 0.0
        %2293 = vmatpush1.msra.mxu0 %v2166
        %2294 = vmatprep.subr.mxu0 0.0
        %2295 = vmatpush1.msra.mxu0 %v2165
        %2296 = vmatprep.subr.mxu0 0.0
        %2297 = vmatpush1.msra.mxu0 %v2164
        %2298 = vmatprep.subr.mxu0 0.0
        %2299 = vmatpush1.msra.mxu0 %v2163
        %2300 = vmatprep.subr.mxu0 0.0
        %2301 = vmatpush1.msra.mxu0 %v2162
        %2302 = vmatprep.subr.mxu0 0.0
        %2303 = vmatpush1.msra.mxu0 %v2161
        %2304 = vmatprep.subr.mxu0 0.0
        %2305 = vmatpush1.msra.mxu0 %v2160
        %2306 = vmatprep.subr.mxu0 0.0
        %2307 = vmatpush1.msra.mxu0 %v2159
        %2308 = vmatprep.subr.mxu0 0.0
        %2309 = vmatpush1.msra.mxu0 %v2158
        %2310 = vmatprep.subr.mxu0 0.0
        %2311 = vmatpush1.msra.mxu0 %v2157
        %2312 = vmatprep.subr.mxu0 0.0
        %2313 = vmatpush1.msra.mxu0 %v2156
        %2314 = vmatprep.subr.mxu0 0.0
        %2315 = vmatpush1.msra.mxu0 %v2155
        %2316 = vmatprep.subr.mxu0 0.0
        %2317 = vmatpush1.msra.mxu0 %v2154
        %2318 = vmatprep.subr.mxu0 0.0
        %2319 = vmatpush1.msra.mxu0 %v2153
        %2320 = vmatprep.subr.mxu0 0.0
        %2321 = vmatpush2.msra.mxu0 0.0
        %2322 = vmatprep.subr.mxu0 0.0
        %2323 = vmatpush2.msra.mxu0 0.0
        %2324 = vmatprep.subr.mxu0 0.0
        %2325 = vmatpush2.msra.mxu0 0.0
        %2326 = vmatprep.subr.mxu0 0.0
        %2327 = vmatpush2.msra.mxu0 0.0
        %2328 = vmatprep.subr.mxu0 0.0
        %2329 = vmatpush2.msra.mxu0 0.0
        %2330 = vmatprep.subr.mxu0 0.0
        %2331 = vmatpush2.msra.mxu0 0.0
        %2332 = vmatprep.subr.mxu0 0.0
        %2333 = vmatpush2.msra.mxu0 0.0
        %2334 = vmatprep.subr.mxu0 0.0
        %2335 = vmatpush2.msra.mxu0 0.0
        %2336 = vmatprep.subr.mxu0 0.0
        %2337 = vmatpush2.msra.mxu0 0.0
        %2338 = vmatprep.subr.mxu0 0.0
        %2339 = vmatpush2.msra.mxu0 0.0
        %2340 = vmatprep.subr.mxu0 0.0
        %2341 = vmatpush2.msra.mxu0 %v2174
        %2342 = vmatprep.subr.mxu0 0.0
        %2343 = vmatpush2.msra.mxu0 %v2173
        %2344 = vmatprep.subr.mxu0 0.0
        %2345 = vmatpush2.msra.mxu0 %v2172
        %2346 = vmatprep.subr.mxu0 0.0
        %2347 = vmatpush2.msra.mxu0 %v2171
        %2348 = vmatprep.subr.mxu0 0.0
        %2349 = vmatpush2.msra.mxu0 %v2170
        %2350 = vmatprep.subr.mxu0 0.0
        %2351 = vmatpush2.msra.mxu0 %v2169
        %2352 = vmatprep.mubr.f32.mxu0 %v2209
        %2353 = vmatmul.mubr.f32.gmra.mxu0 %v2191
        %v2354 = vpop.f32.mrf.mxu0
        %v2355 = vadd.f32 %v2280, %v2354
        %v2356 = vpop.f32.mrf.mxu0
        %2357 = vmatprep.mubr.f32.mxu0 %v2211
        %2358 = vmatmul.mubr.f32.gmra.mxu0 %v2200
        %v2359 = vpop.f32.mrf.mxu0
        %v2360 = vadd.f32 %v2285, %v2359
        %v2361 = vpop.f32.mrf.mxu0
        %2362 = vdwg.mxu0
        %v2363 = vadd.f32 %v2104, %v2355
        %v2364 = vadd.f32 %v2109, %v2360
        %v2365 = vld [vmem:[#allocation12] sm:$0x1]
        %v2367 = vlaneseq
        %v2368 = vshrl.u32 %v2367, 7
        %v2369 = vsub.s32 0, %v2368
        %v2370 = vrot.slane %v2365, %v2369
        %v2372 = vadd.f32 %v2363, %v2370
        %v2373 = vadd.f32 %v2364, %v2370
        %2374 = vst [vmem:[%s296] sm:$0xff] %v2372
        %2375 = vst [vmem:[%s296 + $0x8] sm:$0xff] %v2373
        %s2376 = sand.u32 %s142, 1
        %s2377 = scalar_lea.sflag [#allocation6], %s2376
        %s2378 = sand.u32 %s142, 1
        %s2379 = smul.addr %s2378, 16
        %s2380 = scalar_lea.vmem [#allocation13], %s2379
        // Predicated region
        $region61: #{tpu_custom_call.1} parent=39 // pred_check
          %p2381 = pneg %p152
        $region62: #{tpu_custom_call.1} parent=39 // pred_check_branch
          %2383 = sbr.rel (%p2381) target = $region64
        $region63: #{tpu_custom_call.1} parent=39 // pred_region
          %s2385 = ssub.s32 256, 256
          %2386 = vsyncadd %s2377, %s2385
          %s2387 = smul.addr %s24, 2
          %s2388 = smul.addr %s2387, 128
          %s2389 = scalar_lea.hbm %s5, %s2388
          %s2390 = sshll.u32 %s2380, 4
          %s2391 = int_to_ptr.vmem [resolvable:$true] %s2390
          %2396 = dma.vmem_to_hbm [thread:$0]  %s2391, 256, %s2389, %s2377, 128, 128, 8
        $region64: #{tpu_custom_call.1} parent=39 // pred_fallthru
          _
      $region40: #{tpu_custom_call.1} parent=5 // pred_fallthru
        _
      %p2397 = scmp.le.s32.totalorder 2, %s19
      // Predicated region
      $region65: #{tpu_custom_call.1} parent=5 // pred_check
        %p2398 = pneg %p2397
      $region66: #{tpu_custom_call.1} parent=5 // pred_check_branch
        %2400 = sbr.rel (%p2398) target = $region68
      $region67: #{tpu_custom_call.1} parent=5 // pred_region
        %s2401 = ssub.s32 %s19, 2
        // Predicated region
        $region69: #{tpu_custom_call.1} parent=67 // pred_check
          %p2402 = pneg %p158
        $region70: #{tpu_custom_call.1} parent=67 // pred_check_branch
          %2404 = sbr.rel (%p2402) target = $region72
        $region71: #{tpu_custom_call.1} parent=67 // pred_region
          %s2405 = sand.u32 %s143, 1
          %s2406 = scalar_lea.sflag [#allocation6], %s2405
          %s2407 = sand.u32 %s143, 1
          %s2408 = smul.addr %s2407, 16
          %s2409 = scalar_lea.vmem [#allocation13], %s2408
          %2410 = dma.done %s2406, 256
        $region72: #{tpu_custom_call.1} parent=67 // pred_fallthru
          _
      $region68: #{tpu_custom_call.1} parent=5 // pred_fallthru
        _
    $region6: #{tpu_custom_call.1} parent=1 // loop_footer
      %s23 = sadd.s32 1, %s19
    $region7: #{tpu_custom_call.1} parent=1 // loop_footer_branch
      %18 = sbr.rel target = $region3
    $region8: #{tpu_custom_call.1} parent=1 // loop_exit
      _
    %2411 = vsyncpa [#allocation5], 1
    %s2412 = scalar_lea.sflag [#allocation5], 1
    %2413 = vsyncpa %s2412, 1
    %2414 = vsyncpa [#allocation8], 1
    %2415 = vsyncpa [#allocation11], 1
    %2416 = vsyncpa [#allocation6], 1
    %s2417 = scalar_lea.sflag [#allocation6], 1
    %2418 = vsyncpa %s2417, 1

</llo_original>
